<compile_context>
chip_gen: v7x
topology: tpu7x:2x2x1
jax: 0.10.0
libtpu: 0.0.40
codegen_flags: <defaults>
</compile_context>

<pallas_src>
import math
import functools

import jax
import jax.numpy as jnp
from jax.experimental import pallas as pl
from jax.experimental.pallas import tpu as pltpu


def _tpu_generation() -> int:
    """Best-effort TPU generation detection (4/5/6/7)."""
    try:
        kind = jax.devices()[0].device_kind.lower()
    except Exception:
        return 6
    if "v7" in kind or "7x" in kind:
        return 7
    if "v6" in kind:
        return 6
    if "v5" in kind:
        return 5
    if "v4" in kind:
        return 4
    return 6


def _vmem_limit_bytes() -> int:
    """~85% of physical VMEM, capped at 100 MiB (v5e/v6e ≈100 MiB, v7x ≈54 MiB)."""
    cap = 64 * 1024 * 1024
    try:
        cap = int(getattr(pltpu.get_tpu_info(), "vmem_capacity_bytes", cap))
    except Exception:
        pass
    return min(int(cap * 0.85), 100 * 1024 * 1024)


def _mhsa_kernel(x_ref, wq_ref, bq_ref, wkv_ref, bkv_ref, wo_ref, bo_ref,
                 lnw_ref, lnb_ref, out_ref, attn_ref, kt_scr, vt_scr,
                 *, n_heads: int, d_head: int, q_tile: int, softmax_dtype):
    """Grid = (batch, query-tile).

    x_ref    : (1, S, D)       full-sequence input block (resident per batch)
    wq_ref   : (D, D)          Q weight, pre-transposed, 1/sqrt(d_head) folded (bf16)
    bq_ref   : (1, D)          Q bias (f32, pre-scaled)
    wkv_ref  : (2D, D)         [Wk; Wv] in PyTorch (out, in) layout (bf16)
    bkv_ref  : (2D, 1)         [bk; bv] (f32)
    wo_ref   : (D, D)          output projection, pre-transposed (bf16)
    bo_ref   : (1, D)          output projection bias (f32)
    ln*_ref  : (1, D)          layernorm gamma / beta (f32)
    out_ref  : (1, TQ, D)      output tile
    attn_ref : (1, TQ, S)      head-averaged attention tile
    kt/vt_scr: (H, d_head, S)  bf16 transposed, head-major K / V (per batch)
    """
    qi = pl.program_id(1)
    d_model = n_heads * d_head
    seq_len = x_ref.shape[1]

    # ---- once per batch element: fused K/V projection ----------------------
    # Stored head-major AND transposed so (a) the scratch lane dim is S
    # (lane-dense) and (b) no reshape+transpose of activations is needed.
    @pl.when(qi == 0)
    def _():
        xf = x_ref[0].astype(jnp.bfloat16)                              # (S, D)
        # (2D, S) = [Wk;Wv] . x^T — contraction on the last dims of both
        # operands (MXU-native "NT" form), no activation transpose.
        kvt = jnp.einsum("ed,sd->es", wkv_ref[...], xf,
                         preferred_element_type=jnp.float32) + bkv_ref[...]
        kt_scr[...] = kvt[:d_model].reshape(n_heads, d_head, seq_len
                                            ).astype(jnp.bfloat16)
        vt_scr[...] = kvt[d_model:].reshape(n_heads, d_head, seq_len
                                            ).astype(jnp.bfloat16)

    # ---- per query tile -----------------------------------------------------
    if q_tile == seq_len:                         # static single-tile fast path
        x_tile = x_ref[0]
    else:
        q0 = pl.multiple_of(qi * q_tile, q_tile)
        x_tile = x_ref[0, pl.ds(q0, q_tile), :]

    # Q projection for this tile only (no per-batch Q scratch).
    q_full = jnp.dot(x_tile.astype(jnp.bfloat16), wq_ref[...],
                     preferred_element_type=jnp.float32) + bq_ref[0]    # (TQ, D)
    qh = (q_full.reshape(q_tile, n_heads, d_head)
          .transpose(1, 0, 2).astype(jnp.bfloat16))                     # (H, TQ, Dh)

    # Scores against transposed K (contraction on the RHS sublane dim).
    s = jnp.einsum("hqd,hdk->hqk", qh, kt_scr[...],
                   preferred_element_type=jnp.float32)                  # (H, TQ, S) f32

    # Softmax: reductions in f32; elementwise path in `softmax_dtype`
    # (bf16 on v6e/v7x, f32 on v5e which has no bf16 VPU/EUP).
    m = jnp.max(s, axis=-1, keepdims=True)
    e = jnp.exp((s - m).astype(softmax_dtype))
    denom = jnp.sum(e, axis=-1, keepdims=True, dtype=jnp.float32)
    attn = e * pl.reciprocal(denom, approx=True).astype(softmax_dtype)  # (H, TQ, S)
    # NOTE: dropout(p=0.1) is identity in eval mode; mask is None in the spec.

    # Context against transposed V (MXU "NT" form, contraction over keys).
    ctx = jnp.einsum("hqk,hdk->hqd", attn.astype(jnp.bfloat16), vt_scr[...],
                     preferred_element_type=jnp.float32)                # (H, TQ, Dh)
    context = ctx.transpose(1, 0, 2).reshape(q_tile, d_model)           # (TQ, D) f32

    proj = jnp.dot(context.astype(jnp.bfloat16), wo_ref[...],
                   preferred_element_type=jnp.float32) + bo_ref[0]

    # Residual + LayerNorm in f32 (eps = 1e-5, PyTorch default).
    y = x_tile.astype(jnp.float32) + proj
    mu = jnp.mean(y, axis=-1, keepdims=True)
    c = y - mu
    var = jnp.mean(c * c, axis=-1, keepdims=True)
    out_ref[0] = (c * jax.lax.rsqrt(var + 1e-5) * lnw_ref[0] + lnb_ref[0]
                  ).astype(out_ref.dtype)

    # Head-averaged attention (f32 accumulation over the small head axis).
    attn_ref[0] = jnp.mean(attn, axis=0, dtype=jnp.float32).astype(attn_ref.dtype)


def mhsa_forward(x, params, *, n_heads: int, q_tile=None, softmax_dtype=None,
                 attn_dtype=jnp.float32):
    """x: (B, S, D) float32. Returns (output (B,S,D), avg_attention (B,S,S)).

    attn_dtype=jnp.bfloat16 halves the (B,S,S) HBM writeback if lower-precision
    attention weights are acceptable for interpretability.
    """
    B, S, D = x.shape
    assert D % n_heads == 0, "d_model must be divisible by n_heads"
    d_head = D // n_heads
    scale = 1.0 / math.sqrt(d_head)

    gen = _tpu_generation()
    if q_tile is None:
        # v5e: 128-wide MXU -> 128; v6e/v7x: 256.  For very long S on v7x pass
        # a smaller q_tile so H*TQ*S intermediates stay well under ~20 MB.
        q_tile = 128 if gen <= 5 else 256
    tq = min(q_tile, S)
    assert S % tq == 0, "seq_len must be divisible by the query tile"
    nq = S // tq
    if softmax_dtype is None:
        softmax_dtype = jnp.float32 if gen <= 5 else jnp.bfloat16

    # MXU operands in bf16 (pre-transposed so y = x @ W); biases / LN in f32.
    # 1/sqrt(d_head) folded into the Q weight & bias.
    wq = (params["wq"].T * scale).astype(jnp.bfloat16)                   # (D, D)
    bq = (params["bq"] * scale)[None, :].astype(jnp.float32)             # (1, D)
    wkv = jnp.concatenate([params["wk"], params["wv"]], axis=0
                          ).astype(jnp.bfloat16)                         # (2D, D)
    bkv = jnp.concatenate([params["bk"], params["bv"]])[:, None
                          ].astype(jnp.float32)                          # (2D, 1)
    wo = params["wo"].T.astype(jnp.bfloat16)                             # (D, D)
    bo = params["bo"][None, :].astype(jnp.float32)
    lnw = params["ln_w"][None, :].astype(jnp.float32)
    lnb = params["ln_b"][None, :].astype(jnp.float32)

    kernel = functools.partial(_mhsa_kernel, n_heads=n_heads, d_head=d_head,
                               q_tile=tq, softmax_dtype=softmax_dtype)

    # Constant-index weights: single-buffer (no overlap benefit; halves VMEM).
    def wspec(shape):
        return pl.BlockSpec(shape, lambda b, qi: (0, 0),
                            pipeline_mode=pl.Buffered(1))

    out, attn = pl.pallas_call(
        kernel,
        out_shape=(
            jax.ShapeDtypeStruct((B, S, D), x.dtype),
            jax.ShapeDtypeStruct((B, S, S), attn_dtype),
        ),
        grid_spec=pltpu.PrefetchScalarGridSpec(
            num_scalar_prefetch=0,
            grid=(B, nq),
            in_specs=[
                # x stays double-buffered to overlap the next batch element's
                # fetch; on v7x (64 MiB VMEM) it may be worth Buffered(1) too.
                pl.BlockSpec((1, S, D), lambda b, qi: (b, 0, 0)),     # x (full seq)
                wspec((D, D)),          # Wq^T (scaled, bf16)
                wspec((1, D)),          # bq (scaled)
                wspec((2 * D, D)),      # [Wk; Wv] (bf16)
                wspec((2 * D, 1)),      # [bk; bv]
                wspec((D, D)),          # Wo^T (bf16)
                wspec((1, D)),          # bo
                wspec((1, D)),          # ln gamma
                wspec((1, D)),          # ln beta
            ],
            out_specs=[
                pl.BlockSpec((1, tq, D), lambda b, qi: (b, qi, 0)),
                pl.BlockSpec((1, tq, S), lambda b, qi: (b, qi, 0)),
            ],
            scratch_shapes=[
                pltpu.VMEM((n_heads, d_head, S), jnp.bfloat16),       # K^T
                pltpu.VMEM((n_heads, d_head, S), jnp.bfloat16),       # V^T
            ],
        ),
        # Batch axis "parallel" (megacore); q-tile axis "arbitrary" because the
        # K/V scratch cached at qi==0 is carried across tiles of one batch.
        # TODO(synk): for v7x small-batch inference, hoist the K/V projection
        # into its own pass so the q-tile axis can also shard across both TCs.
        compiler_params=pltpu.CompilerParams(
            dimension_semantics=("parallel", "arbitrary"),
            vmem_limit_bytes=_vmem_limit_bytes(),
        ),
    )(x, wq, bq, wkv, bkv, wo, bo, lnw, lnb)
    return out, attn


def init_params(key, d_model):
    """Deterministic synthetic parameters (PyTorch nn.Linear-style init)."""
    ks = jax.random.split(key, 8)
    bound = 1.0 / math.sqrt(d_model)

    def lin(kw, kb):
        w = jax.random.uniform(kw, (d_model, d_model), jnp.float32, -bound, bound)
        b = jax.random.uniform(kb, (d_model,), jnp.float32, -bound, bound)
        return w, b

    wq, bq = lin(ks[0], ks[1])
    wk, bk = lin(ks[2], ks[3])
    wv, bv = lin(ks[4], ks[5])
    wo, bo = lin(ks[6], ks[7])
    return {
        "wq": wq, "bq": bq,
        "wk": wk, "bk": bk,
        "wv": wv, "bv": bv,
        "wo": wo, "bo": bo,
        "ln_w": jnp.ones((d_model,), jnp.float32),   # PyTorch LayerNorm default
        "ln_b": jnp.zeros((d_model,), jnp.float32),
    }


def _reference(x, params, n_heads):
    """Pure-JAX f32 reference mirroring the PyTorch forward (eval mode)."""
    B, S, D = x.shape
    dh = D // n_heads
    q = x @ params["wq"].T + params["bq"]
    k = x @ params["wk"].T + params["bk"]
    v = x @ params["wv"].T + params["bv"]
    q = q.reshape(B, S, n_heads, dh).transpose(0, 2, 1, 3)
    k = k.reshape(B, S, n_heads, dh).transpose(0, 2, 1, 3)
    v = v.reshape(B, S, n_heads, dh).transpose(0, 2, 1, 3)
    scores = jnp.einsum("bhqd,bhkd->bhqk", q, k) / math.sqrt(dh)
    attn = jax.nn.softmax(scores, axis=-1)
    ctx = jnp.einsum("bhqk,bhkd->bhqd", attn, v)
    ctx = ctx.transpose(0, 2, 1, 3).reshape(B, S, D)
    out = ctx @ params["wo"].T + params["bo"]
    y = x + out
    mu = y.mean(-1, keepdims=True)
    var = ((y - mu) ** 2).mean(-1, keepdims=True)
    y = (y - mu) / jnp.sqrt(var + 1e-5) * params["ln_w"] + params["ln_b"]
    return y, attn.mean(axis=1)


if __name__ == "__main__":
    B, S, D, H = 2, 8, 32, 4   # batch, seq_len, d_model, n_heads

    key = jax.random.PRNGKey(0)
    kx, kp = jax.random.split(key)
    x = jax.random.normal(kx, (B, S, D), jnp.float32)
    params = init_params(kp, D)

    out, avg_attn = mhsa_forward(x, params, n_heads=H)
    out = jax.block_until_ready(out)
    avg_attn = jax.block_until_ready(avg_attn)

    ref_out, ref_attn = _reference(x, params, H)
    # bf16 MXU operands + (chip-dependent) bf16 softmax path -> loosened tolerances.
    out_err = float(jnp.max(jnp.abs(out - ref_out)))
    attn_err = float(jnp.max(jnp.abs(avg_attn.astype(jnp.float32) - ref_attn)))
    assert jnp.allclose(out, ref_out, atol=3e-2, rtol=3e-2), (
        "output mismatch, max|diff|=%e" % out_err)
    assert jnp.allclose(avg_attn.astype(jnp.float32), ref_attn,
                        atol=2e-2, rtol=2e-2), (
        "attn mismatch, max|diff|=%e" % attn_err)

    print("KERNEL_OK")
</pallas_src>

<mosaic_0001>
module attributes {stable_mosaic.version = 11 : i64} {
  func.func @_mhsa_kernel(%arg0: i32, %arg1: i32, %arg2: memref<1x8x32xf32, #tpu.memory_space<vmem>>, %arg3: memref<32x32xbf16, #tpu.memory_space<vmem>>, %arg4: memref<1x32xf32, #tpu.memory_space<vmem>>, %arg5: memref<64x32xbf16, #tpu.memory_space<vmem>>, %arg6: memref<64x1xf32, #tpu.memory_space<vmem>>, %arg7: memref<32x32xbf16, #tpu.memory_space<vmem>>, %arg8: memref<1x32xf32, #tpu.memory_space<vmem>>, %arg9: memref<1x32xf32, #tpu.memory_space<vmem>>, %arg10: memref<1x32xf32, #tpu.memory_space<vmem>>, %arg11: memref<1x8x32xf32, #tpu.memory_space<vmem>>, %arg12: memref<1x8x8xf32, #tpu.memory_space<vmem>>, %arg13: memref<4x8x8xbf16, #tpu.memory_space<vmem>>, %arg14: memref<4x8x8xbf16, #tpu.memory_space<vmem>>) attributes {dimension_semantics = [#tpu.dimension_semantics<parallel>, #tpu.dimension_semantics<arbitrary>], iteration_bounds = array<i64: 2, 1>, scalar_prefetch = 0 : i64, scratch_operands = 2 : i64, tpu.core_type = #tpu.core_type<tc>, window_params = [{transform_indices = @transform_0, window_bounds = array<i64: 1, 8, 32>}, {pipeline_mode = #tpu.pipeline_mode<synchronous>, transform_indices = @transform_1, window_bounds = array<i64: 32, 32>}, {pipeline_mode = #tpu.pipeline_mode<synchronous>, transform_indices = @transform_2, window_bounds = array<i64: 1, 32>}, {pipeline_mode = #tpu.pipeline_mode<synchronous>, transform_indices = @transform_3, window_bounds = array<i64: 64, 32>}, {pipeline_mode = #tpu.pipeline_mode<synchronous>, transform_indices = @transform_4, window_bounds = array<i64: 64, 1>}, {pipeline_mode = #tpu.pipeline_mode<synchronous>, transform_indices = @transform_5, window_bounds = array<i64: 32, 32>}, {pipeline_mode = #tpu.pipeline_mode<synchronous>, transform_indices = @transform_6, window_bounds = array<i64: 1, 32>}, {pipeline_mode = #tpu.pipeline_mode<synchronous>, transform_indices = @transform_7, window_bounds = array<i64: 1, 32>}, {pipeline_mode = #tpu.pipeline_mode<synchronous>, transform_indices = @transform_8, window_bounds = array<i64: 1, 32>}, {transform_indices = @transform_9, window_bounds = array<i64: 1, 8, 32>}, {transform_indices = @transform_10, window_bounds = array<i64: 1, 8, 8>}]} {
    %c0_i32 = arith.constant 0 : i32
    %0 = arith.cmpi eq, %arg1, %c0_i32 : i32
    %1 = arith.extui %0 : i1 to i32
    %c0_i32_0 = arith.constant 0 : i32
    %2 = arith.cmpi ne, %1, %c0_i32_0 : i32
    scf.if %2 {
      %c0_39 = arith.constant 0 : index
      %c0_40 = arith.constant 0 : index
      %c0_41 = arith.constant 0 : index
      %80 = vector.load %arg2[%c0_39, %c0_40, %c0_41] : memref<1x8x32xf32, #tpu.memory_space<vmem>>, vector<1x8x32xf32>
      %81 = vector.shape_cast %80 : vector<1x8x32xf32> to vector<8x32xf32>
      %82 = arith.truncf %81 : vector<8x32xf32> to vector<8x32xbf16>
      %c0_42 = arith.constant 0 : index
      %c0_43 = arith.constant 0 : index
      %83 = vector.load %arg5[%c0_42, %c0_43] : memref<64x32xbf16, #tpu.memory_space<vmem>>, vector<64x32xbf16>
      "tpu.trace_start"() <{level = 10 : i32, message = "ed,sd->es"}> : () -> ()
      %cst_44 = arith.constant dense<0.000000e+00> : vector<64x8xf32>
      %84 = tpu.matmul %83, %82, %cst_44 {dimension_numbers = #tpu.dot_dimension_numbers<[1], [1], [0], [0], [0, 0, 1, 0], [], []>} : vector<64x32xbf16>, vector<8x32xbf16>, vector<64x8xf32> -> vector<64x8xf32>
      "tpu.trace_stop"() : () -> ()
      %c0_45 = arith.constant 0 : index
      %c0_46 = arith.constant 0 : index
      %85 = vector.load %arg6[%c0_45, %c0_46] : memref<64x1xf32, #tpu.memory_space<vmem>>, vector<64x1xf32>
      %86 = vector.broadcast %85 : vector<64x1xf32> to vector<64x8xf32>
      %87 = arith.addf %84, %86 : vector<64x8xf32>
      %88 = vector.extract_strided_slice %87 {offsets = [0, 0], sizes = [32, 8], strides = [1, 1]} : vector<64x8xf32> to vector<32x8xf32>
      %89 = vector.shape_cast %88 : vector<32x8xf32> to vector<4x8x8xf32>
      %90 = arith.truncf %89 : vector<4x8x8xf32> to vector<4x8x8xbf16>
      %c0_47 = arith.constant 0 : index
      %c0_48 = arith.constant 0 : index
      %c0_49 = arith.constant 0 : index
      %91 = vector.load %arg13[%c0_47, %c0_48, %c0_49] : memref<4x8x8xbf16, #tpu.memory_space<vmem>>, vector<4x8x8xbf16>
      tpu.vector_store %arg13[%c0_47, %c0_48, %c0_49], %90 {strides = array<i32>} : memref<4x8x8xbf16, #tpu.memory_space<vmem>>, vector<4x8x8xbf16>,
      %92 = vector.extract_strided_slice %87 {offsets = [32, 0], sizes = [32, 8], strides = [1, 1]} : vector<64x8xf32> to vector<32x8xf32>
      %93 = vector.shape_cast %92 : vector<32x8xf32> to vector<4x8x8xf32>
      %94 = arith.truncf %93 : vector<4x8x8xf32> to vector<4x8x8xbf16>
      %c0_50 = arith.constant 0 : index
      %c0_51 = arith.constant 0 : index
      %c0_52 = arith.constant 0 : index
      %95 = vector.load %arg14[%c0_50, %c0_51, %c0_52] : memref<4x8x8xbf16, #tpu.memory_space<vmem>>, vector<4x8x8xbf16>
      tpu.vector_store %arg14[%c0_50, %c0_51, %c0_52], %94 {strides = array<i32>} : memref<4x8x8xbf16, #tpu.memory_space<vmem>>, vector<4x8x8xbf16>,
    } else {
    }
    %c0 = arith.constant 0 : index
    %c0_1 = arith.constant 0 : index
    %c0_2 = arith.constant 0 : index
    %3 = vector.load %arg2[%c0, %c0_1, %c0_2] : memref<1x8x32xf32, #tpu.memory_space<vmem>>, vector<1x8x32xf32>
    %4 = vector.shape_cast %3 : vector<1x8x32xf32> to vector<8x32xf32>
    %5 = arith.truncf %4 : vector<8x32xf32> to vector<8x32xbf16>
    %c0_3 = arith.constant 0 : index
    %c0_4 = arith.constant 0 : index
    %6 = vector.load %arg3[%c0_3, %c0_4] : memref<32x32xbf16, #tpu.memory_space<vmem>>, vector<32x32xbf16>
    %cst = arith.constant dense<0.000000e+00> : vector<8x32xf32>
    %7 = tpu.matmul %5, %6, %cst {dimension_numbers = #tpu.dot_dimension_numbers<[1], [0], [0], [1], [0, 0, 1, 1], [], []>} : vector<8x32xbf16>, vector<32x32xbf16>, vector<8x32xf32> -> vector<8x32xf32>
    %c0_5 = arith.constant 0 : index
    %c0_6 = arith.constant 0 : index
    %8 = vector.load %arg4[%c0_5, %c0_6] : memref<1x32xf32, #tpu.memory_space<vmem>>, vector<1x32xf32>
    %9 = vector.shape_cast %8 : vector<1x32xf32> to vector<32xf32>
    %10 = vector.shape_cast %9 : vector<32xf32> to vector<1x32xf32>
    %11 = vector.broadcast %10 : vector<1x32xf32> to vector<8x32xf32>
    %12 = arith.addf %7, %11 : vector<8x32xf32>
    %13 = vector.shape_cast %12 : vector<8x32xf32> to vector<8x4x8xf32>
    %14 = tpu.transpose %13, [1, 0, 2] : vector<8x4x8xf32> -> vector<4x8x8xf32>
    %15 = arith.truncf %14 : vector<4x8x8xf32> to vector<4x8x8xbf16>
    %c0_7 = arith.constant 0 : index
    %c0_8 = arith.constant 0 : index
    %c0_9 = arith.constant 0 : index
    %16 = vector.load %arg13[%c0_7, %c0_8, %c0_9] : memref<4x8x8xbf16, #tpu.memory_space<vmem>>, vector<4x8x8xbf16>
    "tpu.trace_start"() <{level = 10 : i32, message = "hqd,hdk->hqk"}> : () -> ()
    %cst_10 = arith.constant dense<0.000000e+00> : vector<4x8x8xf32>
    %17 = tpu.matmul %15, %16, %cst_10 {dimension_numbers = #tpu.dot_dimension_numbers<[2], [1], [1], [2], [0, 0, 0, 1, 1, 2], [0], [0]>} : vector<4x8x8xbf16>, vector<4x8x8xbf16>, vector<4x8x8xf32> -> vector<4x8x8xf32>
    "tpu.trace_stop"() : () -> ()
    %cst_11 = arith.constant dense<0xFF800000> : vector<4x8xf32>
    %18 = vector.multi_reduction <maximumf>, %17, %cst_11 [2] : vector<4x8x8xf32> to vector<4x8xf32>
    %19 = vector.shape_cast %18 : vector<4x8xf32> to vector<4x8x1xf32>
    %20 = vector.broadcast %19 : vector<4x8x1xf32> to vector<4x8x8xf32>
    %21 = arith.subf %17, %20 : vector<4x8x8xf32>
    %22 = arith.truncf %21 : vector<4x8x8xf32> to vector<4x8x8xbf16>
    %23 = math.exp %22 : vector<4x8x8xbf16>
    %24 = arith.extf %23 : vector<4x8x8xbf16> to vector<4x8x8xf32>
    %cst_12 = arith.constant dense<0.000000e+00> : vector<4x8xf32>
    %25 = vector.multi_reduction <add>, %24, %cst_12 [2] : vector<4x8x8xf32> to vector<4x8xf32>
    %26 = vector.shape_cast %25 : vector<4x8xf32> to vector<4x8x1xf32>
    %27 = tpu.reciprocal %26 {approx = true} : vector<4x8x1xf32> -> vector<4x8x1xf32>
    %28 = arith.truncf %27 : vector<4x8x1xf32> to vector<4x8x1xbf16>
    %29 = vector.broadcast %28 : vector<4x8x1xbf16> to vector<4x8x8xbf16>
    %30 = arith.mulf %23, %29 : vector<4x8x8xbf16>
    %c0_13 = arith.constant 0 : index
    %c0_14 = arith.constant 0 : index
    %c0_15 = arith.constant 0 : index
    %31 = vector.load %arg14[%c0_13, %c0_14, %c0_15] : memref<4x8x8xbf16, #tpu.memory_space<vmem>>, vector<4x8x8xbf16>
    "tpu.trace_start"() <{level = 10 : i32, message = "hqk,hdk->hqd"}> : () -> ()
    %cst_16 = arith.constant dense<0.000000e+00> : vector<4x8x8xf32>
    %32 = tpu.matmul %30, %31, %cst_16 {dimension_numbers = #tpu.dot_dimension_numbers<[2], [2], [1], [1], [0, 0, 0, 1, 1, 1], [0], [0]>} : vector<4x8x8xbf16>, vector<4x8x8xbf16>, vector<4x8x8xf32> -> vector<4x8x8xf32>
    "tpu.trace_stop"() : () -> ()
    %33 = tpu.transpose %32, [1, 0, 2] : vector<4x8x8xf32> -> vector<8x4x8xf32>
    %34 = vector.shape_cast %33 : vector<8x4x8xf32> to vector<8x32xf32>
    %35 = arith.truncf %34 : vector<8x32xf32> to vector<8x32xbf16>
    %c0_17 = arith.constant 0 : index
    %c0_18 = arith.constant 0 : index
    %36 = vector.load %arg7[%c0_17, %c0_18] : memref<32x32xbf16, #tpu.memory_space<vmem>>, vector<32x32xbf16>
    %cst_19 = arith.constant dense<0.000000e+00> : vector<8x32xf32>
    %37 = tpu.matmul %35, %36, %cst_19 {dimension_numbers = #tpu.dot_dimension_numbers<[1], [0], [0], [1], [0, 0, 1, 1], [], []>} : vector<8x32xbf16>, vector<32x32xbf16>, vector<8x32xf32> -> vector<8x32xf32>
    %c0_20 = arith.constant 0 : index
    %c0_21 = arith.constant 0 : index
    %38 = vector.load %arg8[%c0_20, %c0_21] : memref<1x32xf32, #tpu.memory_space<vmem>>, vector<1x32xf32>
    %39 = vector.shape_cast %38 : vector<1x32xf32> to vector<32xf32>
    %40 = vector.shape_cast %39 : vector<32xf32> to vector<1x32xf32>
    %41 = vector.broadcast %40 : vector<1x32xf32> to vector<8x32xf32>
    %42 = arith.addf %37, %41 : vector<8x32xf32>
    %43 = arith.addf %4, %42 : vector<8x32xf32>
    %cst_22 = arith.constant dense<0.000000e+00> : vector<8xf32>
    %44 = vector.multi_reduction <add>, %43, %cst_22 [1] : vector<8x32xf32> to vector<8xf32>
    %45 = vector.shape_cast %44 : vector<8xf32> to vector<8x1xf32>
    %cst_23 = arith.constant 3.200000e+01 : f32
    %46 = vector.broadcast %cst_23 : f32 to vector<8x1xf32>
    %47 = arith.divf %45, %46 : vector<8x1xf32>
    %48 = vector.broadcast %47 : vector<8x1xf32> to vector<8x32xf32>
    %49 = arith.subf %43, %48 : vector<8x32xf32>
    %50 = arith.mulf %49, %49 : vector<8x32xf32>
    %cst_24 = arith.constant dense<0.000000e+00> : vector<8xf32>
    %51 = vector.multi_reduction <add>, %50, %cst_24 [1] : vector<8x32xf32> to vector<8xf32>
    %52 = vector.shape_cast %51 : vector<8xf32> to vector<8x1xf32>
    %cst_25 = arith.constant 3.200000e+01 : f32
    %53 = vector.broadcast %cst_25 : f32 to vector<8x1xf32>
    %54 = arith.divf %52, %53 : vector<8x1xf32>
    %cst_26 = arith.constant 9.99999974E-6 : f32
    %55 = vector.broadcast %cst_26 : f32 to vector<8x1xf32>
    %56 = arith.addf %54, %55 : vector<8x1xf32>
    %57 = math.rsqrt %56 : vector<8x1xf32>
    %58 = vector.broadcast %57 : vector<8x1xf32> to vector<8x32xf32>
    %59 = arith.mulf %49, %58 : vector<8x32xf32>
    %c0_27 = arith.constant 0 : index
    %c0_28 = arith.constant 0 : index
    %60 = vector.load %arg9[%c0_27, %c0_28] : memref<1x32xf32, #tpu.memory_space<vmem>>, vector<1x32xf32>
    %61 = vector.shape_cast %60 : vector<1x32xf32> to vector<32xf32>
    %62 = vector.shape_cast %61 : vector<32xf32> to vector<1x32xf32>
    %63 = vector.broadcast %62 : vector<1x32xf32> to vector<8x32xf32>
    %64 = arith.mulf %59, %63 : vector<8x32xf32>
    %c0_29 = arith.constant 0 : index
    %c0_30 = arith.constant 0 : index
    %65 = vector.load %arg10[%c0_29, %c0_30] : memref<1x32xf32, #tpu.memory_space<vmem>>, vector<1x32xf32>
    %66 = vector.shape_cast %65 : vector<1x32xf32> to vector<32xf32>
    %67 = vector.shape_cast %66 : vector<32xf32> to vector<1x32xf32>
    %68 = vector.broadcast %67 : vector<1x32xf32> to vector<8x32xf32>
    %69 = arith.addf %64, %68 : vector<8x32xf32>
    %c0_31 = arith.constant 0 : index
    %c0_32 = arith.constant 0 : index
    %c0_33 = arith.constant 0 : index
    %70 = vector.load %arg11[%c0_31, %c0_32, %c0_33] : memref<1x8x32xf32, #tpu.memory_space<vmem>>, vector<1x8x32xf32>
    %71 = vector.shape_cast %70 : vector<1x8x32xf32> to vector<8x32xf32>
    %72 = vector.shape_cast %69 : vector<8x32xf32> to vector<1x8x32xf32>
    tpu.vector_store %arg11[%c0_31, %c0_32, %c0_33], %72 {strides = array<i32>} : memref<1x8x32xf32, #tpu.memory_space<vmem>>, vector<1x8x32xf32>,
    %73 = arith.extf %30 : vector<4x8x8xbf16> to vector<4x8x8xf32>
    %cst_34 = arith.constant dense<0.000000e+00> : vector<8x8xf32>
    %74 = vector.multi_reduction <add>, %73, %cst_34 [0] : vector<4x8x8xf32> to vector<8x8xf32>
    %cst_35 = arith.constant 4.000000e+00 : f32
    %75 = vector.broadcast %cst_35 : f32 to vector<8x8xf32>
    %76 = arith.divf %74, %75 : vector<8x8xf32>
    %c0_36 = arith.constant 0 : index
    %c0_37 = arith.constant 0 : index
    %c0_38 = arith.constant 0 : index
    %77 = vector.load %arg12[%c0_36, %c0_37, %c0_38] : memref<1x8x8xf32, #tpu.memory_space<vmem>>, vector<1x8x8xf32>
    %78 = vector.shape_cast %77 : vector<1x8x8xf32> to vector<8x8xf32>
    %79 = vector.shape_cast %76 : vector<8x8xf32> to vector<1x8x8xf32>
    tpu.vector_store %arg12[%c0_36, %c0_37, %c0_38], %79 {strides = array<i32>} : memref<1x8x8xf32, #tpu.memory_space<vmem>>, vector<1x8x8xf32>,
    return
  }
  func.func @transform_0(%arg0: i32, %arg1: i32) -> (i32, i32, i32) {
    %c0_i32 = arith.constant 0 : i32
    %c0_i32_0 = arith.constant 0 : i32
    %c0_i32_1 = arith.constant 0 : i32
    return %arg0, %c0_i32, %c0_i32_0 : i32, i32, i32
  }
  func.func @transform_1(%arg0: i32, %arg1: i32) -> (i32, i32) {
    %c0_i32 = arith.constant 0 : i32
    %c0_i32_0 = arith.constant 0 : i32
    %c0_i32_1 = arith.constant 0 : i32
    return %c0_i32, %c0_i32_0 : i32, i32
  }
  func.func @transform_2(%arg0: i32, %arg1: i32) -> (i32, i32) {
    %c0_i32 = arith.constant 0 : i32
    %c0_i32_0 = arith.constant 0 : i32
    %c0_i32_1 = arith.constant 0 : i32
    return %c0_i32, %c0_i32_0 : i32, i32
  }
  func.func @transform_3(%arg0: i32, %arg1: i32) -> (i32, i32) {
    %c0_i32 = arith.constant 0 : i32
    %c0_i32_0 = arith.constant 0 : i32
    %c0_i32_1 = arith.constant 0 : i32
    return %c0_i32, %c0_i32_0 : i32, i32
  }
  func.func @transform_4(%arg0: i32, %arg1: i32) -> (i32, i32) {
    %c0_i32 = arith.constant 0 : i32
    %c0_i32_0 = arith.constant 0 : i32
    %c0_i32_1 = arith.constant 0 : i32
    return %c0_i32, %c0_i32_0 : i32, i32
  }
  func.func @transform_5(%arg0: i32, %arg1: i32) -> (i32, i32) {
    %c0_i32 = arith.constant 0 : i32
    %c0_i32_0 = arith.constant 0 : i32
    %c0_i32_1 = arith.constant 0 : i32
    return %c0_i32, %c0_i32_0 : i32, i32
  }
  func.func @transform_6(%arg0: i32, %arg1: i32) -> (i32, i32) {
    %c0_i32 = arith.constant 0 : i32
    %c0_i32_0 = arith.constant 0 : i32
    %c0_i32_1 = arith.constant 0 : i32
    return %c0_i32, %c0_i32_0 : i32, i32
  }
  func.func @transform_7(%arg0: i32, %arg1: i32) -> (i32, i32) {
    %c0_i32 = arith.constant 0 : i32
    %c0_i32_0 = arith.constant 0 : i32
    %c0_i32_1 = arith.constant 0 : i32
    return %c0_i32, %c0_i32_0 : i32, i32
  }
  func.func @transform_8(%arg0: i32, %arg1: i32) -> (i32, i32) {
    %c0_i32 = arith.constant 0 : i32
    %c0_i32_0 = arith.constant 0 : i32
    %c0_i32_1 = arith.constant 0 : i32
    return %c0_i32, %c0_i32_0 : i32, i32
  }
  func.func @transform_9(%arg0: i32, %arg1: i32) -> (i32, i32, i32) {
    %c0_i32 = arith.constant 0 : i32
    %c0_i32_0 = arith.constant 0 : i32
    return %arg0, %arg1, %c0_i32 : i32, i32, i32
  }
  func.func @transform_10(%arg0: i32, %arg1: i32) -> (i32, i32, i32) {
    %c0_i32 = arith.constant 0 : i32
    %c0_i32_0 = arith.constant 0 : i32
    return %arg0, %arg1, %c0_i32 : i32, i32, i32
  }
}

</mosaic_0001>

<llo_original>
// kernel: tpu_custom_call.1
$region0: #{tpu_custom_call.1}
  #allocation0 [shape = 'u32[]', space=smem, size = 0x4, offset = 0x4, fixed_abs, tag = 'smem constant byte address 0x4 - core index']
  #allocation1 [shape = 'u32[144,128]{1,0:T(1,128)}', space=vmem, size = 0x12000, scoped, tag = 'internal scratch']
  #allocation2 [shape = 'bf16[4,8,8]{2,1,0:T(8,128)(2,1)}', space=vmem, size = 0x2000, scoped, tag = 'scratch operand']
  #allocation3 [shape = 'bf16[4,8,8]{2,1,0:T(8,128)(2,1)}', space=vmem, size = 0x2000, scoped, tag = 'scratch operand']
  %s0 = inlined_call_operand.vmem [shape: f32[2,8,32], index: 0, kind: input, shape index: {}]
  %s1 = inlined_call_operand.vmem [shape: bf16[32,32], index: 1, kind: input, shape index: {}]
  %s2 = inlined_call_operand.vmem [shape: f32[1,32], index: 2, kind: input, shape index: {}]
  %s3 = inlined_call_operand.vmem [shape: bf16[64,32], index: 3, kind: input, shape index: {}]
  %s4 = inlined_call_operand.vmem [shape: f32[64,1], index: 4, kind: input, shape index: {}]
  %s5 = inlined_call_operand.vmem [shape: bf16[32,32], index: 5, kind: input, shape index: {}]
  %s6 = inlined_call_operand.vmem [shape: f32[1,32], index: 6, kind: input, shape index: {}]
  %s7 = inlined_call_operand.vmem [shape: f32[1,32], index: 7, kind: input, shape index: {}]
  %s8 = inlined_call_operand.vmem [shape: f32[1,32], index: 8, kind: input, shape index: {}]
  %s9 = inlined_call_operand.hbm [shape: f32[2,8,32], index: 9, kind: output, shape index: {0}]
  %s10 = inlined_call_operand.hbm [shape: f32[2,8,8], index: 10, kind: output, shape index: {1}]
  %11 = xla_tuple %s9, %s10
  %s12 = sld [smem:[#allocation0]]
  $region81: #{tpu_custom_call.1} parent=0
    _
  %s14 = ssub.s32 1, %s12
  %s15 = scalar_select 0, %s14, %s12
  $region1: #{tpu_custom_call.1} parent=0
    #allocation4 [shape = 'u8[8192]{0}', space=vmem, size = 0x2000, scoped, tag = 'output window, operand 0']
    #allocation5 [shape = 's32[2]{0}', space=sflag, size = 0x8, scoped, tag = 'scoped memory for tpu_custom_call.1']
    #allocation6 [shape = 'u8[8192]{0}', space=vmem, size = 0x2000, scoped, tag = 'output window, operand 1']
    #allocation7 [shape = 's32[2]{0}', space=sflag, size = 0x8, scoped, tag = 'scoped memory for tpu_custom_call.1']
    %16 = vsyncpa [#allocation5], 0
    %s17 = scalar_lea.sflag [#allocation5], 1
    %18 = vsyncpa %s17, 0
    %19 = vsyncpa [#allocation7], 0
    %s20 = scalar_lea.sflag [#allocation7], 1
    %21 = vsyncpa %s20, 0
    loop: start=0, step=1, limit=4
    $region2: #{tpu_custom_call.1} parent=1 // loop_pre_header
      _
    $region3: #{tpu_custom_call.1} parent=1 // loop_header
      %s23 = sphi 0, %s27
      %p24 = scmp.ge.s32.totalorder %s23, 4
      %s30 = sphi 0, %s42
      %s31 = sphi 0, %s38
      %s32 = sphi 0, %s30
      %s33 = sphi 0, %s31
      %s34 = sphi 0, %s32
      %s35 = sphi 0, %s33
      %s45 = sphi 0, %s47
      %s48 = sphi 0, %s45
      %s49 = sphi 0, %s48
      %s65 = sphi 0, %s49
      %s69 = sphi 0, %s69
      %s71 = sphi 0, %s69
      %s72 = sphi 0, %s71
      %s86 = sphi 0, %s72
      %s90 = sphi 0, %s90
      %s92 = sphi 0, %s90
      %s93 = sphi 0, %s92
      %s107 = sphi 0, %s93
      %s111 = sphi 0, %s111
      %s113 = sphi 0, %s111
      %s114 = sphi 0, %s113
      %s128 = sphi 0, %s114
      %s132 = sphi 0, %s132
      %s134 = sphi 0, %s132
      %s135 = sphi 0, %s134
      %s149 = sphi 0, %s135
      %s153 = sphi 0, %s153
      %s155 = sphi 0, %s153
      %s156 = sphi 0, %s155
      %s170 = sphi 0, %s156
      %s174 = sphi 0, %s174
      %s176 = sphi 0, %s174
      %s177 = sphi 0, %s176
      %s191 = sphi 0, %s177
      %s195 = sphi 0, %s195
      %s197 = sphi 0, %s195
      %s198 = sphi 0, %s197
      %s212 = sphi 0, %s198
      %s216 = sphi 0, %s216
      %s218 = sphi 0, %s216
      %s219 = sphi 0, %s218
      %s233 = sphi 0, %s219
      %s241 = sphi 0, %s243
      %s244 = sphi 0, %s241
      %s245 = sphi 0, %s244
      %s261 = sphi 0, %s245
      %s269 = sphi 0, %s271
      %s272 = sphi 0, %s269
      %s273 = sphi 0, %s272
      %s289 = sphi 0, %s273
    $region4: #{tpu_custom_call.1} parent=1 // loop_header_branch
      %26 = sbr.rel (%p24) target = $region8
    $region5: #{tpu_custom_call.1} parent=1 // loop_body
      %s28 = ssub.s32 %s23, 1
      %s29 = ssub.s32 %s23, 2
      %s36 = sadd.s32 1, %s31
      %p37 = scmp.ge.s32.totalorder %s36, 1
      %s38 = scalar_select %p37, 0, %s36
      %s39 = sadd.s32 1, %s30
      %s40 = scalar_select %p37, %s39, %s30
      %p41 = scmp.ge.s32.totalorder %s40, 2
      %s42 = scalar_select %p41, 0, %s40
      %s43 = ssub.s32 %s30, %s42
      %p44 = scmp.eq.s32.totalorder %s43, 0
      %s46 = sadd.s32 %s45, 1
      %s47 = scalar_select %p44, %s45, %s46
      %p50 = pneg %p44
      %p51 = scmp.eq.s32.totalorder %s23, 1
      %p52 = por %p50, %p51
      %p53 = scmp.ne.s32.totalorder %s45, %s48
      %p54 = scmp.eq.s32.totalorder %s23, 0
      %p55 = por %p53, %p54
      %p56 = scmp.ne.s32.totalorder %s45, %s48
      %p57 = scmp.eq.s32.totalorder %s28, 1
      %p58 = por %p56, %p57
      %p59 = scmp.ne.s32.totalorder %s48, %s49
      %p60 = scmp.eq.s32.totalorder %s28, 0
      %p61 = por %p59, %p60
      %p62 = scmp.ne.s32.totalorder %s48, %s49
      %p63 = scmp.eq.s32.totalorder %s29, 1
      %p64 = por %p62, %p63
      %p66 = scmp.ne.s32.totalorder %s49, %s65
      %p67 = scmp.eq.s32.totalorder %s29, 0
      %p68 = por %p66, %p67
      %s70 = sadd.s32 %s69, 1
      %p73 = scmp.eq.s32.totalorder %s23, 1
      %p74 = scmp.ne.s32.totalorder %s69, %s71
      %p75 = scmp.eq.s32.totalorder %s23, 0
      %p76 = por %p74, %p75
      %p77 = scmp.ne.s32.totalorder %s69, %s71
      %p78 = scmp.eq.s32.totalorder %s28, 1
      %p79 = por %p77, %p78
      %p80 = scmp.ne.s32.totalorder %s71, %s72
      %p81 = scmp.eq.s32.totalorder %s28, 0
      %p82 = por %p80, %p81
      %p83 = scmp.ne.s32.totalorder %s71, %s72
      %p84 = scmp.eq.s32.totalorder %s29, 1
      %p85 = por %p83, %p84
      %p87 = scmp.ne.s32.totalorder %s72, %s86
      %p88 = scmp.eq.s32.totalorder %s29, 0
      %p89 = por %p87, %p88
      %s91 = sadd.s32 %s90, 1
      %p94 = scmp.eq.s32.totalorder %s23, 1
      %p95 = scmp.ne.s32.totalorder %s90, %s92
      %p96 = scmp.eq.s32.totalorder %s23, 0
      %p97 = por %p95, %p96
      %p98 = scmp.ne.s32.totalorder %s90, %s92
      %p99 = scmp.eq.s32.totalorder %s28, 1
      %p100 = por %p98, %p99
      %p101 = scmp.ne.s32.totalorder %s92, %s93
      %p102 = scmp.eq.s32.totalorder %s28, 0
      %p103 = por %p101, %p102
      %p104 = scmp.ne.s32.totalorder %s92, %s93
      %p105 = scmp.eq.s32.totalorder %s29, 1
      %p106 = por %p104, %p105
      %p108 = scmp.ne.s32.totalorder %s93, %s107
      %p109 = scmp.eq.s32.totalorder %s29, 0
      %p110 = por %p108, %p109
      %s112 = sadd.s32 %s111, 1
      %p115 = scmp.eq.s32.totalorder %s23, 1
      %p116 = scmp.ne.s32.totalorder %s111, %s113
      %p117 = scmp.eq.s32.totalorder %s23, 0
      %p118 = por %p116, %p117
      %p119 = scmp.ne.s32.totalorder %s111, %s113
      %p120 = scmp.eq.s32.totalorder %s28, 1
      %p121 = por %p119, %p120
      %p122 = scmp.ne.s32.totalorder %s113, %s114
      %p123 = scmp.eq.s32.totalorder %s28, 0
      %p124 = por %p122, %p123
      %p125 = scmp.ne.s32.totalorder %s113, %s114
      %p126 = scmp.eq.s32.totalorder %s29, 1
      %p127 = por %p125, %p126
      %p129 = scmp.ne.s32.totalorder %s114, %s128
      %p130 = scmp.eq.s32.totalorder %s29, 0
      %p131 = por %p129, %p130
      %s133 = sadd.s32 %s132, 1
      %p136 = scmp.eq.s32.totalorder %s23, 1
      %p137 = scmp.ne.s32.totalorder %s132, %s134
      %p138 = scmp.eq.s32.totalorder %s23, 0
      %p139 = por %p137, %p138
      %p140 = scmp.ne.s32.totalorder %s132, %s134
      %p141 = scmp.eq.s32.totalorder %s28, 1
      %p142 = por %p140, %p141
      %p143 = scmp.ne.s32.totalorder %s134, %s135
      %p144 = scmp.eq.s32.totalorder %s28, 0
      %p145 = por %p143, %p144
      %p146 = scmp.ne.s32.totalorder %s134, %s135
      %p147 = scmp.eq.s32.totalorder %s29, 1
      %p148 = por %p146, %p147
      %p150 = scmp.ne.s32.totalorder %s135, %s149
      %p151 = scmp.eq.s32.totalorder %s29, 0
      %p152 = por %p150, %p151
      %s154 = sadd.s32 %s153, 1
      %p157 = scmp.eq.s32.totalorder %s23, 1
      %p158 = scmp.ne.s32.totalorder %s153, %s155
      %p159 = scmp.eq.s32.totalorder %s23, 0
      %p160 = por %p158, %p159
      %p161 = scmp.ne.s32.totalorder %s153, %s155
      %p162 = scmp.eq.s32.totalorder %s28, 1
      %p163 = por %p161, %p162
      %p164 = scmp.ne.s32.totalorder %s155, %s156
      %p165 = scmp.eq.s32.totalorder %s28, 0
      %p166 = por %p164, %p165
      %p167 = scmp.ne.s32.totalorder %s155, %s156
      %p168 = scmp.eq.s32.totalorder %s29, 1
      %p169 = por %p167, %p168
      %p171 = scmp.ne.s32.totalorder %s156, %s170
      %p172 = scmp.eq.s32.totalorder %s29, 0
      %p173 = por %p171, %p172
      %s175 = sadd.s32 %s174, 1
      %p178 = scmp.eq.s32.totalorder %s23, 1
      %p179 = scmp.ne.s32.totalorder %s174, %s176
      %p180 = scmp.eq.s32.totalorder %s23, 0
      %p181 = por %p179, %p180
      %p182 = scmp.ne.s32.totalorder %s174, %s176
      %p183 = scmp.eq.s32.totalorder %s28, 1
      %p184 = por %p182, %p183
      %p185 = scmp.ne.s32.totalorder %s176, %s177
      %p186 = scmp.eq.s32.totalorder %s28, 0
      %p187 = por %p185, %p186
      %p188 = scmp.ne.s32.totalorder %s176, %s177
      %p189 = scmp.eq.s32.totalorder %s29, 1
      %p190 = por %p188, %p189
      %p192 = scmp.ne.s32.totalorder %s177, %s191
      %p193 = scmp.eq.s32.totalorder %s29, 0
      %p194 = por %p192, %p193
      %s196 = sadd.s32 %s195, 1
      %p199 = scmp.eq.s32.totalorder %s23, 1
      %p200 = scmp.ne.s32.totalorder %s195, %s197
      %p201 = scmp.eq.s32.totalorder %s23, 0
      %p202 = por %p200, %p201
      %p203 = scmp.ne.s32.totalorder %s195, %s197
      %p204 = scmp.eq.s32.totalorder %s28, 1
      %p205 = por %p203, %p204
      %p206 = scmp.ne.s32.totalorder %s197, %s198
      %p207 = scmp.eq.s32.totalorder %s28, 0
      %p208 = por %p206, %p207
      %p209 = scmp.ne.s32.totalorder %s197, %s198
      %p210 = scmp.eq.s32.totalorder %s29, 1
      %p211 = por %p209, %p210
      %p213 = scmp.ne.s32.totalorder %s198, %s212
      %p214 = scmp.eq.s32.totalorder %s29, 0
      %p215 = por %p213, %p214
      %s217 = sadd.s32 %s216, 1
      %p220 = scmp.eq.s32.totalorder %s23, 1
      %p221 = scmp.ne.s32.totalorder %s216, %s218
      %p222 = scmp.eq.s32.totalorder %s23, 0
      %p223 = por %p221, %p222
      %p224 = scmp.ne.s32.totalorder %s216, %s218
      %p225 = scmp.eq.s32.totalorder %s28, 1
      %p226 = por %p224, %p225
      %p227 = scmp.ne.s32.totalorder %s218, %s219
      %p228 = scmp.eq.s32.totalorder %s28, 0
      %p229 = por %p227, %p228
      %p230 = scmp.ne.s32.totalorder %s218, %s219
      %p231 = scmp.eq.s32.totalorder %s29, 1
      %p232 = por %p230, %p231
      %p234 = scmp.ne.s32.totalorder %s219, %s233
      %p235 = scmp.eq.s32.totalorder %s29, 0
      %p236 = por %p234, %p235
      %s237 = ssub.s32 %s30, %s42
      %s238 = ssub.s32 %s31, %s38
      %s239 = sor.u32 %s237, %s238
      %p240 = scmp.eq.s32.totalorder %s239, 0
      %s242 = sadd.s32 %s241, 1
      %s243 = scalar_select %p240, %s241, %s242
      %p246 = pneg %p240
      %p247 = scmp.eq.s32.totalorder %s23, 1
      %p248 = por %p246, %p247
      %p249 = scmp.ne.s32.totalorder %s241, %s244
      %p250 = scmp.eq.s32.totalorder %s23, 0
      %p251 = por %p249, %p250
      %p252 = scmp.ne.s32.totalorder %s241, %s244
      %p253 = scmp.eq.s32.totalorder %s28, 1
      %p254 = por %p252, %p253
      %p255 = scmp.ne.s32.totalorder %s244, %s245
      %p256 = scmp.eq.s32.totalorder %s28, 0
      %p257 = por %p255, %p256
      %p258 = scmp.ne.s32.totalorder %s244, %s245
      %p259 = scmp.eq.s32.totalorder %s29, 1
      %p260 = por %p258, %p259
      %p262 = scmp.ne.s32.totalorder %s245, %s261
      %p263 = scmp.eq.s32.totalorder %s29, 0
      %p264 = por %p262, %p263
      %s265 = ssub.s32 %s30, %s42
      %s266 = ssub.s32 %s31, %s38
      %s267 = sor.u32 %s265, %s266
      %p268 = scmp.eq.s32.totalorder %s267, 0
      %s270 = sadd.s32 %s269, 1
      %s271 = scalar_select %p268, %s269, %s270
      %p274 = pneg %p268
      %p275 = scmp.eq.s32.totalorder %s23, 1
      %p276 = por %p274, %p275
      %p277 = scmp.ne.s32.totalorder %s269, %s272
      %p278 = scmp.eq.s32.totalorder %s23, 0
      %p279 = por %p277, %p278
      %p280 = scmp.ne.s32.totalorder %s269, %s272
      %p281 = scmp.eq.s32.totalorder %s28, 1
      %p282 = por %p280, %p281
      %p283 = scmp.ne.s32.totalorder %s272, %s273
      %p284 = scmp.eq.s32.totalorder %s28, 0
      %p285 = por %p283, %p284
      %p286 = scmp.ne.s32.totalorder %s272, %s273
      %p287 = scmp.eq.s32.totalorder %s29, 1
      %p288 = por %p286, %p287
      %p290 = scmp.ne.s32.totalorder %s273, %s289
      %p291 = scmp.eq.s32.totalorder %s29, 0
      %p292 = por %p290, %p291
      %p293 = scmp.le.s32.totalorder 1, %s23
      %p294 = scmp.lt.s32.totalorder %s23, 3
      %p295 = pnand %p293, %p294
      %p296 = pneg %p295
      // Predicated region
      $region9: #{tpu_custom_call.1} parent=5 // pred_check
        _
      $region10: #{tpu_custom_call.1} parent=5 // pred_check_branch
        %298 = sbr.rel (%p295) target = $region12
      $region11: #{tpu_custom_call.1} parent=5 // pred_region
        %s299 = ssub.s32 %s23, 1
        // Predicated region
        $region13: #{tpu_custom_call.1} parent=11 // pred_check
          %p300 = pneg %p82
        $region14: #{tpu_custom_call.1} parent=11 // pred_check_branch
          %302 = sbr.rel (%p300) target = $region16
        $region15: #{tpu_custom_call.1} parent=11 // pred_region
          _
        $region16: #{tpu_custom_call.1} parent=11 // pred_fallthru
          _
        // Predicated region
        $region17: #{tpu_custom_call.1} parent=11 // pred_check
          %p303 = pneg %p103
        $region18: #{tpu_custom_call.1} parent=11 // pred_check_branch
          %305 = sbr.rel (%p303) target = $region20
        $region19: #{tpu_custom_call.1} parent=11 // pred_region
          _
        $region20: #{tpu_custom_call.1} parent=11 // pred_fallthru
          _
        // Predicated region
        $region21: #{tpu_custom_call.1} parent=11 // pred_check
          %p306 = pneg %p124
        $region22: #{tpu_custom_call.1} parent=11 // pred_check_branch
          %308 = sbr.rel (%p306) target = $region24
        $region23: #{tpu_custom_call.1} parent=11 // pred_region
          _
        $region24: #{tpu_custom_call.1} parent=11 // pred_fallthru
          _
        // Predicated region
        $region25: #{tpu_custom_call.1} parent=11 // pred_check
          %p309 = pneg %p145
        $region26: #{tpu_custom_call.1} parent=11 // pred_check_branch
          %311 = sbr.rel (%p309) target = $region28
        $region27: #{tpu_custom_call.1} parent=11 // pred_region
          _
        $region28: #{tpu_custom_call.1} parent=11 // pred_fallthru
          _
        // Predicated region
        $region29: #{tpu_custom_call.1} parent=11 // pred_check
          %p312 = pneg %p166
        $region30: #{tpu_custom_call.1} parent=11 // pred_check_branch
          %314 = sbr.rel (%p312) target = $region32
        $region31: #{tpu_custom_call.1} parent=11 // pred_region
          _
        $region32: #{tpu_custom_call.1} parent=11 // pred_fallthru
          _
        // Predicated region
        $region33: #{tpu_custom_call.1} parent=11 // pred_check
          %p315 = pneg %p187
        $region34: #{tpu_custom_call.1} parent=11 // pred_check_branch
          %317 = sbr.rel (%p315) target = $region36
        $region35: #{tpu_custom_call.1} parent=11 // pred_region
          _
        $region36: #{tpu_custom_call.1} parent=11 // pred_fallthru
          _
        // Predicated region
        $region37: #{tpu_custom_call.1} parent=11 // pred_check
          %p318 = pneg %p208
        $region38: #{tpu_custom_call.1} parent=11 // pred_check_branch
          %320 = sbr.rel (%p318) target = $region40
        $region39: #{tpu_custom_call.1} parent=11 // pred_region
          _
        $region40: #{tpu_custom_call.1} parent=11 // pred_fallthru
          _
        // Predicated region
        $region41: #{tpu_custom_call.1} parent=11 // pred_check
          %p321 = pneg %p229
        $region42: #{tpu_custom_call.1} parent=11 // pred_check_branch
          %323 = sbr.rel (%p321) target = $region44
        $region43: #{tpu_custom_call.1} parent=11 // pred_region
          _
        $region44: #{tpu_custom_call.1} parent=11 // pred_fallthru
          _
      $region12: #{tpu_custom_call.1} parent=5 // pred_fallthru
        _
      %p324 = scmp.lt.s32.totalorder %s23, 2
      // Predicated region
      $region45: #{tpu_custom_call.1} parent=5 // pred_check
        %p325 = pneg %p324
      $region46: #{tpu_custom_call.1} parent=5 // pred_check_branch
        %327 = sbr.rel (%p325) target = $region48
      $region47: #{tpu_custom_call.1} parent=5 // pred_region
        // Predicated region
        $region49: #{tpu_custom_call.1} parent=47 // pred_check
          %p328 = pneg %p55
        $region50: #{tpu_custom_call.1} parent=47 // pred_check_branch
          %330 = sbr.rel (%p328) target = $region52
        $region51: #{tpu_custom_call.1} parent=47 // pred_region
          %p331 = scmp.lt.s32.totalorder %s30, 1
          %s332 = scalar_select %p331, %s30, 1
          %s333 = smul.addr %s332, 8
          %s334 = scalar_lea.vmem %s0, %s333
        $region52: #{tpu_custom_call.1} parent=47 // pred_fallthru
          _
      $region48: #{tpu_custom_call.1} parent=5 // pred_fallthru
        _
      %p335 = scmp.le.s32.totalorder 1, %s23
      %p336 = scmp.lt.s32.totalorder %s23, 3
      %p337 = pnand %p335, %p336
      %p338 = pneg %p337
      // Predicated region
      $region53: #{tpu_custom_call.1} parent=5 // pred_check
        _
      $region54: #{tpu_custom_call.1} parent=5 // pred_check_branch
        %340 = sbr.rel (%p337) target = $region56
      $region55: #{tpu_custom_call.1} parent=5 // pred_region
        %s341 = ssub.s32 %s23, 1
        %p342 = scmp.lt.s32.totalorder %s32, 1
        %s343 = scalar_select %p342, %s32, 1
        %s344 = smul.addr %s343, 8
        %s345 = scalar_lea.vmem %s0, %s344
        %p346 = pneg %p61
        %p347 = pneg %p58
        %p348 = pneg %p82
        %p349 = pneg %p79
        %p350 = pneg %p103
        %p351 = pneg %p100
        %p352 = pneg %p124
        %p353 = pneg %p121
        %p354 = pneg %p145
        %p355 = pneg %p142
        %p356 = pneg %p166
        %p357 = pneg %p163
        %p358 = pneg %p187
        %p359 = pneg %p184
        %p360 = pneg %p208
        %p361 = pneg %p205
        %p362 = pneg %p229
        %p363 = pneg %p226
        %p364 = pneg %p257
        %p365 = pneg %p254
        %s366 = sand.u32 %s244, 1
        %s367 = scalar_lea.sflag [#allocation5], %s366
        %s368 = sand.u32 %s244, 1
        %s369 = smul.addr %s368, 8
        %s370 = scalar_lea.vmem [#allocation4], %s369
        %p371 = pneg %p285
        %p372 = pneg %p282
        %s373 = sand.u32 %s272, 1
        %s374 = scalar_lea.sflag [#allocation7], %s373
        %s375 = sand.u32 %s272, 1
        %s376 = smul.addr %s375, 8
        %s377 = scalar_lea.vmem [#allocation6], %s376
        %p378 = scmp.lt.s32.totalorder %s32, 1
        %s379 = scalar_select %p378, %s32, 1
        %s380 = smul.addr %s379, 8
        %s381 = scalar_lea.vmem %s0, %s380
        %p383 = scmp.eq.s32.totalorder %s33, 0
        // Predicated region
        $region57: #{tpu_custom_call.1} parent=55 // pred_check
          %p384 = pneg %p383
        $region58: #{tpu_custom_call.1} parent=55 // pred_check_branch
          %386 = sbr.rel (%p384) target = $region60
        $region59: #{tpu_custom_call.1} parent=55 // pred_region
          %v387 = vld [vmem:[%s381] sm:$0xff]
          %v388 = vpack.c.bf16 %v387, %v387
          %v389 = vld [vmem:[%s3] sm:$0xf]
          %v390 = vld [vmem:[%s3 + $0x4] sm:$0xf]
          %v391 = vld [vmem:[%s3 + $0x8] sm:$0xf]
          %v392 = vld [vmem:[%s3 + $0xc] sm:$0xf]
          %v393 = vld [vmem:[%s3 + $0x10] sm:$0xf]
          %v394 = vld [vmem:[%s3 + $0x14] sm:$0xf]
          %v395 = vld [vmem:[%s3 + $0x18] sm:$0xf]
          %v396 = vld [vmem:[%s3 + $0x1c] sm:$0xf]
          %v397 = vld [vmem:[%s4] sm:$0xff]
          %v398 = vld [vmem:[%s4 + $0x8] sm:$0xff]
          %v399 = vld [vmem:[%s4 + $0x10] sm:$0xff]
          %v400 = vld [vmem:[%s4 + $0x18] sm:$0xff]
          %v401 = vld [vmem:[%s4 + $0x20] sm:$0xff]
          %v402 = vld [vmem:[%s4 + $0x28] sm:$0xff]
          %v403 = vld [vmem:[%s4 + $0x30] sm:$0xff]
          %v404 = vld [vmem:[%s4 + $0x38] sm:$0xff]
          %406 = vset.pattern.permute.xlu0 0
          %407 = vperm.xlu0 %406, %v397
          %v408 = vpop.permute.xlu0 %407
          %411 = vset.pattern.permute.xlu0 0
          %412 = vperm.xlu0 %411, %v398
          %v413 = vpop.permute.xlu0 %412
          %416 = vset.pattern.permute.xlu0 0
          %417 = vperm.xlu0 %416, %v399
          %v418 = vpop.permute.xlu0 %417
          %421 = vset.pattern.permute.xlu0 0
          %422 = vperm.xlu0 %421, %v400
          %v423 = vpop.permute.xlu0 %422
          %426 = vset.pattern.permute.xlu0 0
          %427 = vperm.xlu0 %426, %v401
          %v428 = vpop.permute.xlu0 %427
          %431 = vset.pattern.permute.xlu0 0
          %432 = vperm.xlu0 %431, %v402
          %v433 = vpop.permute.xlu0 %432
          %436 = vset.pattern.permute.xlu0 0
          %437 = vperm.xlu0 %436, %v403
          %v438 = vpop.permute.xlu0 %437
          %441 = vset.pattern.permute.xlu0 0
          %442 = vperm.xlu0 %441, %v404
          %v443 = vpop.permute.xlu0 %442
          %v453 = vunpack.c.l.b16 %v389
          %v454 = vunpack.c.l.b16 %v390
          %v455 = vunpack.c.l.b16 %v391
          %v456 = vunpack.c.l.b16 %v392
          %v457 = vunpack.c.l.b16 %v393
          %v458 = vunpack.c.l.b16 %v394
          %v459 = vunpack.c.l.b16 %v395
          %v460 = vunpack.c.l.b16 %v396
          %v461 = vpack.c.b16 %v454, %v453
          %v462 = vpack.c.b16 %v456, %v455
          %v463 = vpack.c.b16 %v458, %v457
          %v464 = vpack.c.b16 %v460, %v459
          %vm465 = vcmask 261120
          %v467 = vsel %vm465, %v461, 0
          %v470 = vsel %vm465, %v462, 0
          %v473 = vsel %vm465, %v463, 0
          %v476 = vsel %vm465, %v464, 0
          %v479 = vsel %vm465, %v388, 0
          %481 = vmatprep.subr.bf16.mxu0 0
          %482 = vmatpush1.bf16.xpose.msra.mxu0 %v479
          %483 = vmatprep.subr.bf16.mxu0 0
          %484 = vmatpush1.bf16.xpose.msra.mxu0 0
          %485 = vmatprep.subr.bf16.mxu0 0
          %486 = vmatpush1.bf16.xpose.msra.mxu0 0
          %487 = vmatprep.subr.bf16.mxu0 0
          %488 = vmatpush1.bf16.xpose.msra.mxu0 0
          %489 = vmatprep.subr.bf16.mxu0 0
          %490 = vmatpush1.bf16.xpose.msra.mxu0 0
          %491 = vmatprep.subr.bf16.mxu0 0
          %492 = vmatpush1.bf16.xpose.msra.mxu0 0
          %493 = vmatprep.subr.bf16.mxu0 0
          %494 = vmatpush1.bf16.xpose.msra.mxu0 0
          %495 = vmatprep.subr.bf16.mxu0 0
          %496 = vmatpush1.bf16.xpose.msra.mxu0 0
          %497 = vmatprep.subr.bf16.mxu0 0
          %498 = vmatpush1.bf16.xpose.msra.mxu0 0
          %499 = vmatprep.subr.bf16.mxu0 0
          %500 = vmatpush1.bf16.xpose.msra.mxu0 0
          %501 = vmatprep.subr.bf16.mxu0 0
          %502 = vmatpush1.bf16.xpose.msra.mxu0 0
          %503 = vmatprep.subr.bf16.mxu0 0
          %504 = vmatpush1.bf16.xpose.msra.mxu0 0
          %505 = vmatprep.subr.bf16.mxu0 0
          %506 = vmatpush1.bf16.xpose.msra.mxu0 0
          %507 = vmatprep.subr.bf16.mxu0 0
          %508 = vmatpush1.bf16.xpose.msra.mxu0 0
          %509 = vmatprep.subr.bf16.mxu0 0
          %510 = vmatpush1.bf16.xpose.msra.mxu0 0
          %511 = vmatprep.subr.bf16.mxu0 0
          %512 = vmatpush1.bf16.xpose.msra.mxu0 0
          %513 = vmatprep.mubr.bf16.mxu0 0
          %514 = vmatmul.mubr.bf16.gmra.mrb[0].mxu0 %v467
          %v515 = vpop.f32.mrb[0].mxu0
          %v516 = vadd.f32 %v408, %v515
          %v517 = vpop.f32.mrb[0].mxu0
          %v518 = vpop.f32.mrb[0].mxu0
          %v519 = vadd.f32 %v413, %v518
          %v520 = vpop.f32.mrb[0].mxu0
          %521 = vmatprep.mubr.bf16.mxu0 0
          %522 = vmatmul.mubr.bf16.gmra.mrb[0].mxu0 %v470
          %v523 = vpop.f32.mrb[0].mxu0
          %v524 = vadd.f32 %v418, %v523
          %v525 = vpop.f32.mrb[0].mxu0
          %v526 = vpop.f32.mrb[0].mxu0
          %v527 = vadd.f32 %v423, %v526
          %v528 = vpop.f32.mrb[0].mxu0
          %529 = vmatprep.mubr.bf16.mxu0 0
          %530 = vmatmul.mubr.bf16.gmra.mrb[0].mxu0 %v473
          %v531 = vpop.f32.mrb[0].mxu0
          %v532 = vadd.f32 %v428, %v531
          %v533 = vpop.f32.mrb[0].mxu0
          %v534 = vpop.f32.mrb[0].mxu0
          %v535 = vadd.f32 %v433, %v534
          %v536 = vpop.f32.mrb[0].mxu0
          %537 = vmatprep.mubr.bf16.mxu0 0
          %538 = vmatmul.mubr.bf16.gmra.mrb[0].mxu0 %v476
          %v539 = vpop.f32.mrb[0].mxu0
          %v540 = vadd.f32 %v438, %v539
          %v541 = vpop.f32.mrb[0].mxu0
          %v542 = vpop.f32.mrb[0].mxu0
          %v543 = vadd.f32 %v443, %v542
          %v544 = vpop.f32.mrb[0].mxu0
          %545 = vdwg.mxu0
          %v546 = vpack.c.bf16 %v516, %v516
          %v547 = vpack.c.bf16 %v519, %v519
          %v548 = vpack.c.bf16 %v524, %v524
          %v549 = vpack.c.bf16 %v527, %v527
          %vm550 = vcmask 60416
          %551 = vst.msk [vmem:[#allocation2] sm:$0xf] %vm550, %v546
          %552 = vst.msk [vmem:[#allocation2 + $0x4] sm:$0xf] %vm550, %v547
          %553 = vst.msk [vmem:[#allocation2 + $0x8] sm:$0xf] %vm550, %v548
          %554 = vst.msk [vmem:[#allocation2 + $0xc] sm:$0xf] %vm550, %v549
          %v555 = vpack.c.bf16 %v532, %v532
          %v556 = vpack.c.bf16 %v535, %v535
          %v557 = vpack.c.bf16 %v540, %v540
          %v558 = vpack.c.bf16 %v543, %v543
          %559 = vst.msk [vmem:[#allocation3] sm:$0xf] %vm550, %v555
          %560 = vst.msk [vmem:[#allocation3 + $0x4] sm:$0xf] %vm550, %v556
          %561 = vst.msk [vmem:[#allocation3 + $0x8] sm:$0xf] %vm550, %v557
          %562 = vst.msk [vmem:[#allocation3 + $0xc] sm:$0xf] %vm550, %v558
        $region60: #{tpu_custom_call.1} parent=55 // pred_fallthru
          _
        %v563 = vld [vmem:[%s381] sm:$0xff]
        %v564 = vpack.c.bf16 %v563, %v563
        %v565 = vld [vmem:[%s1] sm:$0xf]
        %v566 = vld [vmem:[%s1 + $0x4] sm:$0xf]
        %v567 = vld [vmem:[%s1 + $0x8] sm:$0xf]
        %v568 = vld [vmem:[%s1 + $0xc] sm:$0xf]
        %v569 = vld [vmem:[%s2] sm:$0x1]
        %v571 = vlaneseq
        %v572 = vshrl.u32 %v571, 7
        %v573 = vsub.s32 0, %v572
        %v574 = vrot.slane %v569, %v573
        %v580 = vunpack.c.l.b16 %v565
        %v581 = vunpack.c.l.b16 %v566
        %v582 = vunpack.c.l.b16 %v567
        %v583 = vunpack.c.l.b16 %v568
        %v584 = vpack.c.b16 %v581, %v580
        %v585 = vpack.c.b16 %v583, %v582
        %vm588 = vcmask 261120
        %v590 = vsel %vm588, %v564, 0
        %592 = vmatprep.subr.bf16.mxu0 0
        %593 = vmatpush1.bf16.msra.mxu0 %v584
        %594 = vmatprep.subr.bf16.mxu0 0
        %595 = vmatpush1.bf16.msra.mxu0 %v585
        %596 = vmatprep.subr.bf16.mxu0 0
        %597 = vmatpush1.bf16.msra.mxu0 0
        %598 = vmatprep.subr.bf16.mxu0 0
        %599 = vmatpush1.bf16.msra.mxu0 0
        %600 = vmatprep.subr.bf16.mxu0 0
        %601 = vmatpush1.bf16.msra.mxu0 0
        %602 = vmatprep.subr.bf16.mxu0 0
        %603 = vmatpush1.bf16.msra.mxu0 0
        %604 = vmatprep.subr.bf16.mxu0 0
        %605 = vmatpush1.bf16.msra.mxu0 0
        %606 = vmatprep.subr.bf16.mxu0 0
        %607 = vmatpush1.bf16.msra.mxu0 0
        %608 = vmatprep.subr.bf16.mxu0 0
        %609 = vmatpush1.bf16.msra.mxu0 0
        %610 = vmatprep.subr.bf16.mxu0 0
        %611 = vmatpush1.bf16.msra.mxu0 0
        %612 = vmatprep.subr.bf16.mxu0 0
        %613 = vmatpush1.bf16.msra.mxu0 0
        %614 = vmatprep.subr.bf16.mxu0 0
        %615 = vmatpush1.bf16.msra.mxu0 0
        %616 = vmatprep.subr.bf16.mxu0 0
        %617 = vmatpush1.bf16.msra.mxu0 0
        %618 = vmatprep.subr.bf16.mxu0 0
        %619 = vmatpush1.bf16.msra.mxu0 0
        %620 = vmatprep.subr.bf16.mxu0 0
        %621 = vmatpush1.bf16.msra.mxu0 0
        %622 = vmatprep.subr.bf16.mxu0 0
        %623 = vmatpush1.bf16.msra.mxu0 0
        %624 = vmatprep.mubr.bf16.mxu0 0
        %625 = vmatmul.mubr.bf16.gmra.mrb[0].mxu0 %v590
        %v626 = vpop.f32.mrb[0].mxu0
        %v627 = vadd.f32 %v574, %v626
        %v628 = vpop.f32.mrb[0].mxu0
        %v629 = vpop.f32.mrb[0].mxu0
        %v630 = vpop.f32.mrb[0].mxu0
        %631 = vdwg.mxu0
        %633 = vrot.lane.b32.xlu0 %v627, 120
        %v634 = vpop.permute.xlu0 %633
        %636 = vrot.lane.b32.xlu0 %v627, 112
        %v637 = vpop.permute.xlu0 %636
        %639 = vrot.lane.b32.xlu0 %v627, 104
        %v640 = vpop.permute.xlu0 %639
        %v642 = vcombine.low %v627, %v637
        %v643 = vcombine.high %v627, %v637
        %v645 = vunpack.c.l.s4 1983009808
        %v646 = vunpack.c.0.s8 %v645
        %v647 = vlaneseq
        %v648 = vshrl.u32 %v647, 7
        %v649 = vsub.s32 %v646, %v648
        %v650 = vrot.slane %v642, %v649
        %v652 = vunpack.c.l.s4 1983009808
        %v653 = vunpack.c.0.s8 %v652
        %v654 = vlaneseq
        %v655 = vshrl.u32 %v654, 7
        %v656 = vsub.s32 %v653, %v655
        %v657 = vrot.slane %v643, %v656
        %v658 = vcombine.low %v634, %v640
        %v659 = vcombine.high %v634, %v640
        %v661 = vunpack.c.l.s4 1983009808
        %v662 = vunpack.c.0.s8 %v661
        %v663 = vlaneseq
        %v664 = vshrl.u32 %v663, 7
        %v665 = vsub.s32 %v662, %v664
        %v666 = vrot.slane %v658, %v665
        %v668 = vunpack.c.l.s4 1983009808
        %v669 = vunpack.c.0.s8 %v668
        %v670 = vlaneseq
        %v671 = vshrl.u32 %v670, 7
        %v672 = vsub.s32 %v669, %v671
        %v673 = vrot.slane %v659, %v672
        %v674 = vcombine.low %v650, %v666
        %v675 = vcombine.high %v650, %v666
        %v677 = vunpack.c.l.s4 1934713408
        %v678 = vunpack.c.0.s8 %v677
        %v679 = vlaneseq
        %v680 = vshrl.u32 %v679, 7
        %v681 = vsub.s32 %v678, %v680
        %v682 = vrot.slane %v674, %v681
        %v684 = vunpack.c.l.s4 1934713408
        %v685 = vunpack.c.0.s8 %v684
        %v686 = vlaneseq
        %v687 = vshrl.u32 %v686, 7
        %v688 = vsub.s32 %v685, %v687
        %v689 = vrot.slane %v675, %v688
        %v690 = vcombine.low %v657, %v673
        %v691 = vcombine.high %v657, %v673
        %v693 = vunpack.c.l.s4 1934713408
        %v694 = vunpack.c.0.s8 %v693
        %v695 = vlaneseq
        %v696 = vshrl.u32 %v695, 7
        %v697 = vsub.s32 %v694, %v696
        %v698 = vrot.slane %v690, %v697
        %v700 = vunpack.c.l.s4 1934713408
        %v701 = vunpack.c.0.s8 %v700
        %v702 = vlaneseq
        %v703 = vshrl.u32 %v702, 7
        %v704 = vsub.s32 %v701, %v703
        %v705 = vrot.slane %v691, %v704
        %v706 = vcombine.high %v682, 0.0
        %v707 = vcombine.high %v689, 0.0
        %v708 = vcombine.high %v698, 0.0
        %v709 = vcombine.high %v705, 0.0
        %v710 = vcombine.low %v682, %v689
        %v712 = vunpack.c.l.s4 1983009808
        %v713 = vunpack.c.0.s8 %v712
        %v714 = vlaneseq
        %v715 = vshrl.u32 %v714, 7
        %v716 = vsub.s32 %v713, %v715
        %v717 = vrot.slane %v710, %v716
        %v718 = vcombine.low %v706, %v707
        %v720 = vunpack.c.l.s4 1983009808
        %v721 = vunpack.c.0.s8 %v720
        %v722 = vlaneseq
        %v723 = vshrl.u32 %v722, 7
        %v724 = vsub.s32 %v721, %v723
        %v725 = vrot.slane %v718, %v724
        %v726 = vcombine.low %v698, %v705
        %v728 = vunpack.c.l.s4 1983009808
        %v729 = vunpack.c.0.s8 %v728
        %v730 = vlaneseq
        %v731 = vshrl.u32 %v730, 7
        %v732 = vsub.s32 %v729, %v731
        %v733 = vrot.slane %v726, %v732
        %v734 = vcombine.low %v708, %v709
        %v736 = vunpack.c.l.s4 1983009808
        %v737 = vunpack.c.0.s8 %v736
        %v738 = vlaneseq
        %v739 = vshrl.u32 %v738, 7
        %v740 = vsub.s32 %v737, %v739
        %v741 = vrot.slane %v734, %v740
        %v742 = vcombine.low %v717, %v725
        %v743 = vcombine.high %v717, %v725
        %v745 = vunpack.c.l.s4 1934713408
        %v746 = vunpack.c.0.s8 %v745
        %v747 = vlaneseq
        %v748 = vshrl.u32 %v747, 7
        %v749 = vsub.s32 %v746, %v748
        %v750 = vrot.slane %v742, %v749
        %v752 = vunpack.c.l.s4 1934713408
        %v753 = vunpack.c.0.s8 %v752
        %v754 = vlaneseq
        %v755 = vshrl.u32 %v754, 7
        %v756 = vsub.s32 %v753, %v755
        %v757 = vrot.slane %v743, %v756
        %v758 = vcombine.low %v733, %v741
        %v759 = vcombine.high %v733, %v741
        %v761 = vunpack.c.l.s4 1934713408
        %v762 = vunpack.c.0.s8 %v761
        %v763 = vlaneseq
        %v764 = vshrl.u32 %v763, 7
        %v765 = vsub.s32 %v762, %v764
        %v766 = vrot.slane %v758, %v765
        %v768 = vunpack.c.l.s4 1934713408
        %v769 = vunpack.c.0.s8 %v768
        %v770 = vlaneseq
        %v771 = vshrl.u32 %v770, 7
        %v772 = vsub.s32 %v769, %v771
        %v773 = vrot.slane %v759, %v772
        %v774 = vcombine.low %v750, %v766
        %v775 = vcombine.high %v750, %v766
        %v776 = vcombine.low %v757, %v773
        %v777 = vcombine.high %v757, %v773
        %v778 = vpack.c.bf16 %v774, %v774
        %v779 = vpack.c.bf16 %v775, %v775
        %v780 = vpack.c.bf16 %v776, %v776
        %v781 = vpack.c.bf16 %v777, %v777
        %v782 = vld [vmem:[#allocation2] sm:$0xf]
        %v783 = vld [vmem:[#allocation2 + $0x4] sm:$0xf]
        %v784 = vld [vmem:[#allocation2 + $0x8] sm:$0xf]
        %v785 = vld [vmem:[#allocation2 + $0xc] sm:$0xf]
        %vm786 = vcmask 64512
        %v788 = vsel %vm786, %v778, 0
        %vm790 = vcmask 1043456
        %v792 = vsel %vm790, %v782, 0
        %794 = vmatprep.subr.bf16.mxu0 0
        %795 = vmatpush1.bf16.msra.mxu0 %v792
        %796 = vmatprep.subr.bf16.mxu0 0
        %797 = vmatpush1.bf16.msra.mxu0 0
        %798 = vmatprep.subr.bf16.mxu0 0
        %799 = vmatpush1.bf16.msra.mxu0 0
        %800 = vmatprep.subr.bf16.mxu0 0
        %801 = vmatpush1.bf16.msra.mxu0 0
        %802 = vmatprep.subr.bf16.mxu0 0
        %803 = vmatpush1.bf16.msra.mxu0 0
        %804 = vmatprep.subr.bf16.mxu0 0
        %805 = vmatpush1.bf16.msra.mxu0 0
        %806 = vmatprep.subr.bf16.mxu0 0
        %807 = vmatpush1.bf16.msra.mxu0 0
        %808 = vmatprep.subr.bf16.mxu0 0
        %809 = vmatpush1.bf16.msra.mxu0 0
        %810 = vmatprep.subr.bf16.mxu0 0
        %811 = vmatpush1.bf16.msra.mxu0 0
        %812 = vmatprep.subr.bf16.mxu0 0
        %813 = vmatpush1.bf16.msra.mxu0 0
        %814 = vmatprep.subr.bf16.mxu0 0
        %815 = vmatpush1.bf16.msra.mxu0 0
        %816 = vmatprep.subr.bf16.mxu0 0
        %817 = vmatpush1.bf16.msra.mxu0 0
        %818 = vmatprep.subr.bf16.mxu0 0
        %819 = vmatpush1.bf16.msra.mxu0 0
        %820 = vmatprep.subr.bf16.mxu0 0
        %821 = vmatpush1.bf16.msra.mxu0 0
        %822 = vmatprep.subr.bf16.mxu0 0
        %823 = vmatpush1.bf16.msra.mxu0 0
        %824 = vmatprep.subr.bf16.mxu0 0
        %825 = vmatpush1.bf16.msra.mxu0 0
        %826 = vmatprep.mubr.bf16.mxu0 0
        %827 = vmatmul.mubr.bf16.gmra.mrb[0].mxu0 %v788
        %v828 = vpop.f32.mrb[0].mxu0
        %v829 = vadd.f32 0.0, %v828
        %v830 = vpop.f32.mrb[0].mxu0
        %v831 = vpop.f32.mrb[0].mxu0
        %v832 = vpop.f32.mrb[0].mxu0
        %833 = vdwg.mxu0
        %v835 = vsel %vm786, %v779, 0
        %v838 = vsel %vm790, %v783, 0
        %840 = vmatprep.subr.bf16.mxu0 0
        %841 = vmatpush1.bf16.msra.mxu0 %v838
        %842 = vmatprep.subr.bf16.mxu0 0
        %843 = vmatpush1.bf16.msra.mxu0 0
        %844 = vmatprep.subr.bf16.mxu0 0
        %845 = vmatpush1.bf16.msra.mxu0 0
        %846 = vmatprep.subr.bf16.mxu0 0
        %847 = vmatpush1.bf16.msra.mxu0 0
        %848 = vmatprep.subr.bf16.mxu0 0
        %849 = vmatpush1.bf16.msra.mxu0 0
        %850 = vmatprep.subr.bf16.mxu0 0
        %851 = vmatpush1.bf16.msra.mxu0 0
        %852 = vmatprep.subr.bf16.mxu0 0
        %853 = vmatpush1.bf16.msra.mxu0 0
        %854 = vmatprep.subr.bf16.mxu0 0
        %855 = vmatpush1.bf16.msra.mxu0 0
        %856 = vmatprep.subr.bf16.mxu0 0
        %857 = vmatpush1.bf16.msra.mxu0 0
        %858 = vmatprep.subr.bf16.mxu0 0
        %859 = vmatpush1.bf16.msra.mxu0 0
        %860 = vmatprep.subr.bf16.mxu0 0
        %861 = vmatpush1.bf16.msra.mxu0 0
        %862 = vmatprep.subr.bf16.mxu0 0
        %863 = vmatpush1.bf16.msra.mxu0 0
        %864 = vmatprep.subr.bf16.mxu0 0
        %865 = vmatpush1.bf16.msra.mxu0 0
        %866 = vmatprep.subr.bf16.mxu0 0
        %867 = vmatpush1.bf16.msra.mxu0 0
        %868 = vmatprep.subr.bf16.mxu0 0
        %869 = vmatpush1.bf16.msra.mxu0 0
        %870 = vmatprep.subr.bf16.mxu0 0
        %871 = vmatpush1.bf16.msra.mxu0 0
        %872 = vmatprep.mubr.bf16.mxu0 0
        %873 = vmatmul.mubr.bf16.gmra.mrb[0].mxu0 %v835
        %v874 = vpop.f32.mrb[0].mxu0
        %v875 = vadd.f32 0.0, %v874
        %v876 = vpop.f32.mrb[0].mxu0
        %v877 = vpop.f32.mrb[0].mxu0
        %v878 = vpop.f32.mrb[0].mxu0
        %879 = vdwg.mxu0
        %v881 = vsel %vm786, %v780, 0
        %v884 = vsel %vm790, %v784, 0
        %886 = vmatprep.subr.bf16.mxu0 0
        %887 = vmatpush1.bf16.msra.mxu0 %v884
        %888 = vmatprep.subr.bf16.mxu0 0
        %889 = vmatpush1.bf16.msra.mxu0 0
        %890 = vmatprep.subr.bf16.mxu0 0
        %891 = vmatpush1.bf16.msra.mxu0 0
        %892 = vmatprep.subr.bf16.mxu0 0
        %893 = vmatpush1.bf16.msra.mxu0 0
        %894 = vmatprep.subr.bf16.mxu0 0
        %895 = vmatpush1.bf16.msra.mxu0 0
        %896 = vmatprep.subr.bf16.mxu0 0
        %897 = vmatpush1.bf16.msra.mxu0 0
        %898 = vmatprep.subr.bf16.mxu0 0
        %899 = vmatpush1.bf16.msra.mxu0 0
        %900 = vmatprep.subr.bf16.mxu0 0
        %901 = vmatpush1.bf16.msra.mxu0 0
        %902 = vmatprep.subr.bf16.mxu0 0
        %903 = vmatpush1.bf16.msra.mxu0 0
        %904 = vmatprep.subr.bf16.mxu0 0
        %905 = vmatpush1.bf16.msra.mxu0 0
        %906 = vmatprep.subr.bf16.mxu0 0
        %907 = vmatpush1.bf16.msra.mxu0 0
        %908 = vmatprep.subr.bf16.mxu0 0
        %909 = vmatpush1.bf16.msra.mxu0 0
        %910 = vmatprep.subr.bf16.mxu0 0
        %911 = vmatpush1.bf16.msra.mxu0 0
        %912 = vmatprep.subr.bf16.mxu0 0
        %913 = vmatpush1.bf16.msra.mxu0 0
        %914 = vmatprep.subr.bf16.mxu0 0
        %915 = vmatpush1.bf16.msra.mxu0 0
        %916 = vmatprep.subr.bf16.mxu0 0
        %917 = vmatpush1.bf16.msra.mxu0 0
        %918 = vmatprep.mubr.bf16.mxu0 0
        %919 = vmatmul.mubr.bf16.gmra.mrb[0].mxu0 %v881
        %v920 = vpop.f32.mrb[0].mxu0
        %v921 = vadd.f32 0.0, %v920
        %v922 = vpop.f32.mrb[0].mxu0
        %v923 = vpop.f32.mrb[0].mxu0
        %v924 = vpop.f32.mrb[0].mxu0
        %925 = vdwg.mxu0
        %v927 = vsel %vm786, %v781, 0
        %v930 = vsel %vm790, %v785, 0
        %932 = vmatprep.subr.bf16.mxu0 0
        %933 = vmatpush1.bf16.msra.mxu0 %v930
        %934 = vmatprep.subr.bf16.mxu0 0
        %935 = vmatpush1.bf16.msra.mxu0 0
        %936 = vmatprep.subr.bf16.mxu0 0
        %937 = vmatpush1.bf16.msra.mxu0 0
        %938 = vmatprep.subr.bf16.mxu0 0
        %939 = vmatpush1.bf16.msra.mxu0 0
        %940 = vmatprep.subr.bf16.mxu0 0
        %941 = vmatpush1.bf16.msra.mxu0 0
        %942 = vmatprep.subr.bf16.mxu0 0
        %943 = vmatpush1.bf16.msra.mxu0 0
        %944 = vmatprep.subr.bf16.mxu0 0
        %945 = vmatpush1.bf16.msra.mxu0 0
        %946 = vmatprep.subr.bf16.mxu0 0
        %947 = vmatpush1.bf16.msra.mxu0 0
        %948 = vmatprep.subr.bf16.mxu0 0
        %949 = vmatpush1.bf16.msra.mxu0 0
        %950 = vmatprep.subr.bf16.mxu0 0
        %951 = vmatpush1.bf16.msra.mxu0 0
        %952 = vmatprep.subr.bf16.mxu0 0
        %953 = vmatpush1.bf16.msra.mxu0 0
        %954 = vmatprep.subr.bf16.mxu0 0
        %955 = vmatpush1.bf16.msra.mxu0 0
        %956 = vmatprep.subr.bf16.mxu0 0
        %957 = vmatpush1.bf16.msra.mxu0 0
        %958 = vmatprep.subr.bf16.mxu0 0
        %959 = vmatpush1.bf16.msra.mxu0 0
        %960 = vmatprep.subr.bf16.mxu0 0
        %961 = vmatpush1.bf16.msra.mxu0 0
        %962 = vmatprep.subr.bf16.mxu0 0
        %963 = vmatpush1.bf16.msra.mxu0 0
        %964 = vmatprep.mubr.bf16.mxu0 0
        %965 = vmatmul.mubr.bf16.gmra.mrb[0].mxu0 %v927
        %v966 = vpop.f32.mrb[0].mxu0
        %v967 = vadd.f32 0.0, %v966
        %v968 = vpop.f32.mrb[0].mxu0
        %v969 = vpop.f32.mrb[0].mxu0
        %v970 = vpop.f32.mrb[0].mxu0
        %971 = vdwg.mxu0
        %v972 = vsel %vm786, %v829, -inf
        %973 = vmax.xlane.f32.xlu0 %v972
        %v974 = vpop.xlane.xlu0 %973
        %v975 = vsel %vm786, %v875, -inf
        %976 = vmax.xlane.f32.xlu0 %v975
        %v977 = vpop.xlane.xlu0 %976
        %v978 = vsel %vm786, %v921, -inf
        %979 = vmax.xlane.f32.xlu0 %v978
        %v980 = vpop.xlane.xlu0 %979
        %v981 = vsel %vm786, %v967, -inf
        %982 = vmax.xlane.f32.xlu0 %v981
        %v983 = vpop.xlane.xlu0 %982
        %v984 = vsub.f32 %v829, %v974
        %v985 = vsub.f32 %v875, %v977
        %v986 = vsub.f32 %v921, %v980
        %v987 = vsub.f32 %v967, %v983
        %v988 = vpack.c.bf16 %v984, %v984
        %v989 = vpack.c.bf16 %v985, %v985
        %v990 = vpack.c.bf16 %v986, %v986
        %v991 = vpack.c.bf16 %v987, %v987
        %v993 = vmul.bf16 %v988, 1069105081
        %v994 = vpow.bf16.pop %v993
        %v996 = vmul.bf16 %v989, 1069105081
        %v997 = vpow.bf16.pop %v996
        %v999 = vmul.bf16 %v990, 1069105081
        %v1000 = vpow.bf16.pop %v999
        %v1002 = vmul.bf16 %v991, 1069105081
        %v1003 = vpow.bf16.pop %v1002
        %v1004 = vunpack.c.l.bf16 %v994
        %v1005 = vunpack.c.l.bf16 %v997
        %v1006 = vunpack.c.l.bf16 %v1000
        %v1007 = vunpack.c.l.bf16 %v1003
        %v1008 = vsel %vm786, %v1004, 0.0
        %1009 = vadd.xlane.f32.xlu0 %v1008
        %v1010 = vpop.xlane.xlu0 %1009
        %v1011 = vsel %vm786, %v1005, 0.0
        %1012 = vadd.xlane.f32.xlu0 %v1011
        %v1013 = vpop.xlane.xlu0 %1012
        %v1014 = vsel %vm786, %v1006, 0.0
        %1015 = vadd.xlane.f32.xlu0 %v1014
        %v1016 = vpop.xlane.xlu0 %1015
        %v1017 = vsel %vm786, %v1007, 0.0
        %1018 = vadd.xlane.f32.xlu0 %v1017
        %v1019 = vpop.xlane.xlu0 %1018
        %v1020 = vrcp.pop %v1010
        %v1021 = vrcp.pop %v1013
        %v1022 = vrcp.pop %v1016
        %v1023 = vrcp.pop %v1019
        %v1024 = vpack.c.bf16 %v1020, %v1020
        %v1025 = vpack.c.bf16 %v1021, %v1021
        %v1026 = vpack.c.bf16 %v1022, %v1022
        %v1027 = vpack.c.bf16 %v1023, %v1023
        %v1028 = vmul.bf16 %v994, %v1024
        %v1029 = vmul.bf16 %v997, %v1025
        %v1030 = vmul.bf16 %v1000, %v1026
        %v1031 = vmul.bf16 %v1003, %v1027
        %v1032 = vld [vmem:[#allocation3] sm:$0xf]
        %v1033 = vld [vmem:[#allocation3 + $0x4] sm:$0xf]
        %v1034 = vld [vmem:[#allocation3 + $0x8] sm:$0xf]
        %v1035 = vld [vmem:[#allocation3 + $0xc] sm:$0xf]
        %v1037 = vsel %vm786, %v1028, 0
        %v1040 = vsel %vm786, %v1032, 0
        %1042 = vmatprep.subr.bf16.mxu0 0
        %1043 = vmatpush1.bf16.xpose.msra.mxu0 %v1040
        %1044 = vmatprep.subr.bf16.mxu0 0
        %1045 = vmatpush1.bf16.xpose.msra.mxu0 0
        %1046 = vmatprep.subr.bf16.mxu0 0
        %1047 = vmatpush1.bf16.xpose.msra.mxu0 0
        %1048 = vmatprep.subr.bf16.mxu0 0
        %1049 = vmatpush1.bf16.xpose.msra.mxu0 0
        %1050 = vmatprep.subr.bf16.mxu0 0
        %1051 = vmatpush1.bf16.xpose.msra.mxu0 0
        %1052 = vmatprep.subr.bf16.mxu0 0
        %1053 = vmatpush1.bf16.xpose.msra.mxu0 0
        %1054 = vmatprep.subr.bf16.mxu0 0
        %1055 = vmatpush1.bf16.xpose.msra.mxu0 0
        %1056 = vmatprep.subr.bf16.mxu0 0
        %1057 = vmatpush1.bf16.xpose.msra.mxu0 0
        %1058 = vmatprep.subr.bf16.mxu0 0
        %1059 = vmatpush1.bf16.xpose.msra.mxu0 0
        %1060 = vmatprep.subr.bf16.mxu0 0
        %1061 = vmatpush1.bf16.xpose.msra.mxu0 0
        %1062 = vmatprep.subr.bf16.mxu0 0
        %1063 = vmatpush1.bf16.xpose.msra.mxu0 0
        %1064 = vmatprep.subr.bf16.mxu0 0
        %1065 = vmatpush1.bf16.xpose.msra.mxu0 0
        %1066 = vmatprep.subr.bf16.mxu0 0
        %1067 = vmatpush1.bf16.xpose.msra.mxu0 0
        %1068 = vmatprep.subr.bf16.mxu0 0
        %1069 = vmatpush1.bf16.xpose.msra.mxu0 0
        %1070 = vmatprep.subr.bf16.mxu0 0
        %1071 = vmatpush1.bf16.xpose.msra.mxu0 0
        %1072 = vmatprep.subr.bf16.mxu0 0
        %1073 = vmatpush1.bf16.xpose.msra.mxu0 0
        %1074 = vmatprep.mubr.bf16.mxu0 0
        %1075 = vmatmul.mubr.bf16.gmra.mrb[0].mxu0 %v1037
        %v1076 = vpop.f32.mrb[0].mxu0
        %v1077 = vadd.f32 0.0, %v1076
        %v1078 = vpop.f32.mrb[0].mxu0
        %v1079 = vpop.f32.mrb[0].mxu0
        %v1080 = vpop.f32.mrb[0].mxu0
        %1081 = vdwg.mxu0
        %v1083 = vsel %vm786, %v1029, 0
        %v1086 = vsel %vm786, %v1033, 0
        %1088 = vmatprep.subr.bf16.mxu0 0
        %1089 = vmatpush1.bf16.xpose.msra.mxu0 %v1086
        %1090 = vmatprep.subr.bf16.mxu0 0
        %1091 = vmatpush1.bf16.xpose.msra.mxu0 0
        %1092 = vmatprep.subr.bf16.mxu0 0
        %1093 = vmatpush1.bf16.xpose.msra.mxu0 0
        %1094 = vmatprep.subr.bf16.mxu0 0
        %1095 = vmatpush1.bf16.xpose.msra.mxu0 0
        %1096 = vmatprep.subr.bf16.mxu0 0
        %1097 = vmatpush1.bf16.xpose.msra.mxu0 0
        %1098 = vmatprep.subr.bf16.mxu0 0
        %1099 = vmatpush1.bf16.xpose.msra.mxu0 0
        %1100 = vmatprep.subr.bf16.mxu0 0
        %1101 = vmatpush1.bf16.xpose.msra.mxu0 0
        %1102 = vmatprep.subr.bf16.mxu0 0
        %1103 = vmatpush1.bf16.xpose.msra.mxu0 0
        %1104 = vmatprep.subr.bf16.mxu0 0
        %1105 = vmatpush1.bf16.xpose.msra.mxu0 0
        %1106 = vmatprep.subr.bf16.mxu0 0
        %1107 = vmatpush1.bf16.xpose.msra.mxu0 0
        %1108 = vmatprep.subr.bf16.mxu0 0
        %1109 = vmatpush1.bf16.xpose.msra.mxu0 0
        %1110 = vmatprep.subr.bf16.mxu0 0
        %1111 = vmatpush1.bf16.xpose.msra.mxu0 0
        %1112 = vmatprep.subr.bf16.mxu0 0
        %1113 = vmatpush1.bf16.xpose.msra.mxu0 0
        %1114 = vmatprep.subr.bf16.mxu0 0
        %1115 = vmatpush1.bf16.xpose.msra.mxu0 0
        %1116 = vmatprep.subr.bf16.mxu0 0
        %1117 = vmatpush1.bf16.xpose.msra.mxu0 0
        %1118 = vmatprep.subr.bf16.mxu0 0
        %1119 = vmatpush1.bf16.xpose.msra.mxu0 0
        %1120 = vmatprep.mubr.bf16.mxu0 0
        %1121 = vmatmul.mubr.bf16.gmra.mrb[0].mxu0 %v1083
        %v1122 = vpop.f32.mrb[0].mxu0
        %v1123 = vadd.f32 0.0, %v1122
        %v1124 = vpop.f32.mrb[0].mxu0
        %v1125 = vpop.f32.mrb[0].mxu0
        %v1126 = vpop.f32.mrb[0].mxu0
        %1127 = vdwg.mxu0
        %v1129 = vsel %vm786, %v1030, 0
        %v1132 = vsel %vm786, %v1034, 0
        %1134 = vmatprep.subr.bf16.mxu0 0
        %1135 = vmatpush1.bf16.xpose.msra.mxu0 %v1132
        %1136 = vmatprep.subr.bf16.mxu0 0
        %1137 = vmatpush1.bf16.xpose.msra.mxu0 0
        %1138 = vmatprep.subr.bf16.mxu0 0
        %1139 = vmatpush1.bf16.xpose.msra.mxu0 0
        %1140 = vmatprep.subr.bf16.mxu0 0
        %1141 = vmatpush1.bf16.xpose.msra.mxu0 0
        %1142 = vmatprep.subr.bf16.mxu0 0
        %1143 = vmatpush1.bf16.xpose.msra.mxu0 0
        %1144 = vmatprep.subr.bf16.mxu0 0
        %1145 = vmatpush1.bf16.xpose.msra.mxu0 0
        %1146 = vmatprep.subr.bf16.mxu0 0
        %1147 = vmatpush1.bf16.xpose.msra.mxu0 0
        %1148 = vmatprep.subr.bf16.mxu0 0
        %1149 = vmatpush1.bf16.xpose.msra.mxu0 0
        %1150 = vmatprep.subr.bf16.mxu0 0
        %1151 = vmatpush1.bf16.xpose.msra.mxu0 0
        %1152 = vmatprep.subr.bf16.mxu0 0
        %1153 = vmatpush1.bf16.xpose.msra.mxu0 0
        %1154 = vmatprep.subr.bf16.mxu0 0
        %1155 = vmatpush1.bf16.xpose.msra.mxu0 0
        %1156 = vmatprep.subr.bf16.mxu0 0
        %1157 = vmatpush1.bf16.xpose.msra.mxu0 0
        %1158 = vmatprep.subr.bf16.mxu0 0
        %1159 = vmatpush1.bf16.xpose.msra.mxu0 0
        %1160 = vmatprep.subr.bf16.mxu0 0
        %1161 = vmatpush1.bf16.xpose.msra.mxu0 0
        %1162 = vmatprep.subr.bf16.mxu0 0
        %1163 = vmatpush1.bf16.xpose.msra.mxu0 0
        %1164 = vmatprep.subr.bf16.mxu0 0
        %1165 = vmatpush1.bf16.xpose.msra.mxu0 0
        %1166 = vmatprep.mubr.bf16.mxu0 0
        %1167 = vmatmul.mubr.bf16.gmra.mrb[0].mxu0 %v1129
        %v1168 = vpop.f32.mrb[0].mxu0
        %v1169 = vadd.f32 0.0, %v1168
        %v1170 = vpop.f32.mrb[0].mxu0
        %v1171 = vpop.f32.mrb[0].mxu0
        %v1172 = vpop.f32.mrb[0].mxu0
        %1173 = vdwg.mxu0
        %v1175 = vsel %vm786, %v1031, 0
        %v1178 = vsel %vm786, %v1035, 0
        %1180 = vmatprep.subr.bf16.mxu0 0
        %1181 = vmatpush1.bf16.xpose.msra.mxu0 %v1178
        %1182 = vmatprep.subr.bf16.mxu0 0
        %1183 = vmatpush1.bf16.xpose.msra.mxu0 0
        %1184 = vmatprep.subr.bf16.mxu0 0
        %1185 = vmatpush1.bf16.xpose.msra.mxu0 0
        %1186 = vmatprep.subr.bf16.mxu0 0
        %1187 = vmatpush1.bf16.xpose.msra.mxu0 0
        %1188 = vmatprep.subr.bf16.mxu0 0
        %1189 = vmatpush1.bf16.xpose.msra.mxu0 0
        %1190 = vmatprep.subr.bf16.mxu0 0
        %1191 = vmatpush1.bf16.xpose.msra.mxu0 0
        %1192 = vmatprep.subr.bf16.mxu0 0
        %1193 = vmatpush1.bf16.xpose.msra.mxu0 0
        %1194 = vmatprep.subr.bf16.mxu0 0
        %1195 = vmatpush1.bf16.xpose.msra.mxu0 0
        %1196 = vmatprep.subr.bf16.mxu0 0
        %1197 = vmatpush1.bf16.xpose.msra.mxu0 0
        %1198 = vmatprep.subr.bf16.mxu0 0
        %1199 = vmatpush1.bf16.xpose.msra.mxu0 0
        %1200 = vmatprep.subr.bf16.mxu0 0
        %1201 = vmatpush1.bf16.xpose.msra.mxu0 0
        %1202 = vmatprep.subr.bf16.mxu0 0
        %1203 = vmatpush1.bf16.xpose.msra.mxu0 0
        %1204 = vmatprep.subr.bf16.mxu0 0
        %1205 = vmatpush1.bf16.xpose.msra.mxu0 0
        %1206 = vmatprep.subr.bf16.mxu0 0
        %1207 = vmatpush1.bf16.xpose.msra.mxu0 0
        %1208 = vmatprep.subr.bf16.mxu0 0
        %1209 = vmatpush1.bf16.xpose.msra.mxu0 0
        %1210 = vmatprep.subr.bf16.mxu0 0
        %1211 = vmatpush1.bf16.xpose.msra.mxu0 0
        %1212 = vmatprep.mubr.bf16.mxu0 0
        %1213 = vmatmul.mubr.bf16.gmra.mrb[0].mxu0 %v1175
        %v1214 = vpop.f32.mrb[0].mxu0
        %v1215 = vadd.f32 0.0, %v1214
        %v1216 = vpop.f32.mrb[0].mxu0
        %v1217 = vpop.f32.mrb[0].mxu0
        %v1218 = vpop.f32.mrb[0].mxu0
        %1219 = vdwg.mxu0
        %v1220 = vcombine.low %v1077, %v1169
        %v1221 = vcombine.high %v1077, %v1169
        %v1223 = vunpack.c.l.s4 1983009808
        %v1224 = vunpack.c.0.s8 %v1223
        %v1225 = vlaneseq
        %v1226 = vshrl.u32 %v1225, 7
        %v1227 = vsub.s32 %v1224, %v1226
        %v1228 = vrot.slane %v1220, %v1227
        %v1230 = vunpack.c.l.s4 1983009808
        %v1231 = vunpack.c.0.s8 %v1230
        %v1232 = vlaneseq
        %v1233 = vshrl.u32 %v1232, 7
        %v1234 = vsub.s32 %v1231, %v1233
        %v1235 = vrot.slane %v1221, %v1234
        %v1236 = vcombine.low %v1123, %v1215
        %v1237 = vcombine.high %v1123, %v1215
        %v1239 = vunpack.c.l.s4 1983009808
        %v1240 = vunpack.c.0.s8 %v1239
        %v1241 = vlaneseq
        %v1242 = vshrl.u32 %v1241, 7
        %v1243 = vsub.s32 %v1240, %v1242
        %v1244 = vrot.slane %v1236, %v1243
        %v1246 = vunpack.c.l.s4 1983009808
        %v1247 = vunpack.c.0.s8 %v1246
        %v1248 = vlaneseq
        %v1249 = vshrl.u32 %v1248, 7
        %v1250 = vsub.s32 %v1247, %v1249
        %v1251 = vrot.slane %v1237, %v1250
        %v1252 = vcombine.low %v1228, %v1244
        %v1253 = vcombine.high %v1228, %v1244
        %v1255 = vunpack.c.l.s4 1934713408
        %v1256 = vunpack.c.0.s8 %v1255
        %v1257 = vlaneseq
        %v1258 = vshrl.u32 %v1257, 7
        %v1259 = vsub.s32 %v1256, %v1258
        %v1260 = vrot.slane %v1252, %v1259
        %v1262 = vunpack.c.l.s4 1934713408
        %v1263 = vunpack.c.0.s8 %v1262
        %v1264 = vlaneseq
        %v1265 = vshrl.u32 %v1264, 7
        %v1266 = vsub.s32 %v1263, %v1265
        %v1267 = vrot.slane %v1253, %v1266
        %v1268 = vcombine.low %v1235, %v1251
        %v1269 = vcombine.high %v1235, %v1251
        %v1271 = vunpack.c.l.s4 1934713408
        %v1272 = vunpack.c.0.s8 %v1271
        %v1273 = vlaneseq
        %v1274 = vshrl.u32 %v1273, 7
        %v1275 = vsub.s32 %v1272, %v1274
        %v1276 = vrot.slane %v1268, %v1275
        %v1278 = vunpack.c.l.s4 1934713408
        %v1279 = vunpack.c.0.s8 %v1278
        %v1280 = vlaneseq
        %v1281 = vshrl.u32 %v1280, 7
        %v1282 = vsub.s32 %v1279, %v1281
        %v1283 = vrot.slane %v1269, %v1282
        %v1284 = vcombine.high %v1260, 0.0
        %v1285 = vcombine.high %v1267, 0.0
        %v1286 = vcombine.high %v1276, 0.0
        %v1287 = vcombine.high %v1283, 0.0
        %v1288 = vcombine.low %v1260, %v1267
        %v1290 = vunpack.c.l.s4 1983009808
        %v1291 = vunpack.c.0.s8 %v1290
        %v1292 = vlaneseq
        %v1293 = vshrl.u32 %v1292, 7
        %v1294 = vsub.s32 %v1291, %v1293
        %v1295 = vrot.slane %v1288, %v1294
        %v1296 = vcombine.low %v1284, %v1285
        %v1298 = vunpack.c.l.s4 1983009808
        %v1299 = vunpack.c.0.s8 %v1298
        %v1300 = vlaneseq
        %v1301 = vshrl.u32 %v1300, 7
        %v1302 = vsub.s32 %v1299, %v1301
        %v1303 = vrot.slane %v1296, %v1302
        %v1304 = vcombine.low %v1276, %v1283
        %v1306 = vunpack.c.l.s4 1983009808
        %v1307 = vunpack.c.0.s8 %v1306
        %v1308 = vlaneseq
        %v1309 = vshrl.u32 %v1308, 7
        %v1310 = vsub.s32 %v1307, %v1309
        %v1311 = vrot.slane %v1304, %v1310
        %v1312 = vcombine.low %v1286, %v1287
        %v1314 = vunpack.c.l.s4 1983009808
        %v1315 = vunpack.c.0.s8 %v1314
        %v1316 = vlaneseq
        %v1317 = vshrl.u32 %v1316, 7
        %v1318 = vsub.s32 %v1315, %v1317
        %v1319 = vrot.slane %v1312, %v1318
        %v1320 = vcombine.low %v1295, %v1303
        %v1321 = vcombine.high %v1295, %v1303
        %v1323 = vunpack.c.l.s4 1934713408
        %v1324 = vunpack.c.0.s8 %v1323
        %v1325 = vlaneseq
        %v1326 = vshrl.u32 %v1325, 7
        %v1327 = vsub.s32 %v1324, %v1326
        %v1328 = vrot.slane %v1320, %v1327
        %v1330 = vunpack.c.l.s4 1934713408
        %v1331 = vunpack.c.0.s8 %v1330
        %v1332 = vlaneseq
        %v1333 = vshrl.u32 %v1332, 7
        %v1334 = vsub.s32 %v1331, %v1333
        %v1335 = vrot.slane %v1321, %v1334
        %v1336 = vcombine.low %v1311, %v1319
        %v1337 = vcombine.high %v1311, %v1319
        %v1339 = vunpack.c.l.s4 1934713408
        %v1340 = vunpack.c.0.s8 %v1339
        %v1341 = vlaneseq
        %v1342 = vshrl.u32 %v1341, 7
        %v1343 = vsub.s32 %v1340, %v1342
        %v1344 = vrot.slane %v1336, %v1343
        %v1346 = vunpack.c.l.s4 1934713408
        %v1347 = vunpack.c.0.s8 %v1346
        %v1348 = vlaneseq
        %v1349 = vshrl.u32 %v1348, 7
        %v1350 = vsub.s32 %v1347, %v1349
        %v1351 = vrot.slane %v1337, %v1350
        %v1352 = vcombine.low %v1328, %v1344
        %v1353 = vcombine.high %v1328, %v1344
        %v1354 = vcombine.low %v1335, %v1351
        %v1355 = vcombine.high %v1335, %v1351
        %1357 = vrot.lane.b32.xlu0 %v1353, 8
        %v1358 = vpop.permute.xlu0 %1357
        %1361 = vrot.lane.b32.xlu0 %v1354, 16
        %v1362 = vpop.permute.xlu0 %1361
        %1365 = vrot.lane.b32.xlu0 %v1355, 24
        %v1366 = vpop.permute.xlu0 %1365
        %v1368 = vsel %vm786, %v1352, %v1358
        %vm1369 = vcmask 130048
        %v1370 = vsel %vm1369, %v1368, %v1362
        %vm1371 = vcmask 195584
        %v1372 = vsel %vm1371, %v1370, %v1366
        %v1373 = vpack.c.bf16 %v1372, %v1372
        %v1374 = vld [vmem:[%s5] sm:$0xf]
        %v1375 = vld [vmem:[%s5 + $0x4] sm:$0xf]
        %v1376 = vld [vmem:[%s5 + $0x8] sm:$0xf]
        %v1377 = vld [vmem:[%s5 + $0xc] sm:$0xf]
        %v1378 = vld [vmem:[%s6] sm:$0x1]
        %v1380 = vlaneseq
        %v1381 = vshrl.u32 %v1380, 7
        %v1382 = vsub.s32 0, %v1381
        %v1383 = vrot.slane %v1378, %v1382
        %v1389 = vunpack.c.l.b16 %v1374
        %v1390 = vunpack.c.l.b16 %v1375
        %v1391 = vunpack.c.l.b16 %v1376
        %v1392 = vunpack.c.l.b16 %v1377
        %v1393 = vpack.c.b16 %v1390, %v1389
        %v1394 = vpack.c.b16 %v1392, %v1391
        %v1398 = vsel %vm588, %v1373, 0
        %1400 = vmatprep.subr.bf16.mxu0 0
        %1401 = vmatpush1.bf16.msra.mxu0 %v1393
        %1402 = vmatprep.subr.bf16.mxu0 0
        %1403 = vmatpush1.bf16.msra.mxu0 %v1394
        %1404 = vmatprep.subr.bf16.mxu0 0
        %1405 = vmatpush1.bf16.msra.mxu0 0
        %1406 = vmatprep.subr.bf16.mxu0 0
        %1407 = vmatpush1.bf16.msra.mxu0 0
        %1408 = vmatprep.subr.bf16.mxu0 0
        %1409 = vmatpush1.bf16.msra.mxu0 0
        %1410 = vmatprep.subr.bf16.mxu0 0
        %1411 = vmatpush1.bf16.msra.mxu0 0
        %1412 = vmatprep.subr.bf16.mxu0 0
        %1413 = vmatpush1.bf16.msra.mxu0 0
        %1414 = vmatprep.subr.bf16.mxu0 0
        %1415 = vmatpush1.bf16.msra.mxu0 0
        %1416 = vmatprep.subr.bf16.mxu0 0
        %1417 = vmatpush1.bf16.msra.mxu0 0
        %1418 = vmatprep.subr.bf16.mxu0 0
        %1419 = vmatpush1.bf16.msra.mxu0 0
        %1420 = vmatprep.subr.bf16.mxu0 0
        %1421 = vmatpush1.bf16.msra.mxu0 0
        %1422 = vmatprep.subr.bf16.mxu0 0
        %1423 = vmatpush1.bf16.msra.mxu0 0
        %1424 = vmatprep.subr.bf16.mxu0 0
        %1425 = vmatpush1.bf16.msra.mxu0 0
        %1426 = vmatprep.subr.bf16.mxu0 0
        %1427 = vmatpush1.bf16.msra.mxu0 0
        %1428 = vmatprep.subr.bf16.mxu0 0
        %1429 = vmatpush1.bf16.msra.mxu0 0
        %1430 = vmatprep.subr.bf16.mxu0 0
        %1431 = vmatpush1.bf16.msra.mxu0 0
        %1432 = vmatprep.mubr.bf16.mxu0 0
        %1433 = vmatmul.mubr.bf16.gmra.mrb[0].mxu0 %v1398
        %v1434 = vpop.f32.mrb[0].mxu0
        %v1435 = vadd.f32 %v1383, %v1434
        %v1436 = vpop.f32.mrb[0].mxu0
        %v1437 = vpop.f32.mrb[0].mxu0
        %v1438 = vpop.f32.mrb[0].mxu0
        %1439 = vdwg.mxu0
        %v1440 = vadd.f32 %v563, %v1435
        %v1441 = vsel %vm588, %v1440, 0.0
        %1442 = vadd.xlane.f32.xlu0 %v1441
        %v1443 = vpop.xlane.xlu0 %1442
        %v1444 = vrcp.pop 32.0
        %v1445 = vmul.f32 %v1443, %v1444
        %v1446 = vsub.f32 %v1440, %v1445
        %v1447 = vmul.f32 %v1446, %v1446
        %v1448 = vsel %vm588, %v1447, 0.0
        %1449 = vadd.xlane.f32.xlu0 %v1448
        %v1450 = vpop.xlane.xlu0 %1449
        %v1451 = vmul.f32 %v1450, %v1444
        %v1452 = vadd.f32 %v1451, 1e-05
        %v1453 = vrsqrt.pop %v1452
        %v1454 = vmul.f32 %v1446, %v1453
        %v1455 = vld [vmem:[%s7] sm:$0x1]
        %v1457 = vlaneseq
        %v1458 = vshrl.u32 %v1457, 7
        %v1459 = vsub.s32 0, %v1458
        %v1460 = vrot.slane %v1455, %v1459
        %v1462 = vmul.f32 %v1454, %v1460
        %v1463 = vld [vmem:[%s8] sm:$0x1]
        %v1465 = vlaneseq
        %v1466 = vshrl.u32 %v1465, 7
        %v1467 = vsub.s32 0, %v1466
        %v1468 = vrot.slane %v1463, %v1467
        %v1470 = vadd.f32 %v1462, %v1468
        %1471 = vst.msk [vmem:[%s370] sm:$0xff] %vm588, %v1470
        %v1472 = vunpack.c.l.bf16 %v1028
        %v1473 = vunpack.c.l.bf16 %v1029
        %v1474 = vunpack.c.l.bf16 %v1030
        %v1475 = vunpack.c.l.bf16 %v1031
        %v1476 = vsel %vm786, %v1472, 0.0
        %v1477 = vsel %vm786, %v1473, 0.0
        %v1478 = vadd.f32 %v1476, %v1477
        %v1479 = vsel %vm786, %v1474, 0.0
        %v1480 = vadd.f32 %v1478, %v1479
        %v1481 = vsel %vm786, %v1475, 0.0
        %v1482 = vadd.f32 %v1480, %v1481
        %v1483 = vrcp.pop 4.0
        %v1484 = vmul.f32 %v1482, %v1483
        %1485 = vst.msk [vmem:[%s377] sm:$0xff] %vm786, %v1484
        %s1486 = sand.u32 %s244, 1
        %s1487 = scalar_lea.sflag [#allocation5], %s1486
        %s1488 = sand.u32 %s244, 1
        %s1489 = smul.addr %s1488, 8
        %s1490 = scalar_lea.vmem [#allocation4], %s1489
        %s1491 = sand.u32 %s272, 1
        %s1492 = scalar_lea.sflag [#allocation7], %s1491
        %s1493 = sand.u32 %s272, 1
        %s1494 = smul.addr %s1493, 8
        %s1495 = scalar_lea.vmem [#allocation6], %s1494
        // Predicated region
        $region61: #{tpu_custom_call.1} parent=55 // pred_check
          %p1496 = pneg %p254
        $region62: #{tpu_custom_call.1} parent=55 // pred_check_branch
          %1498 = sbr.rel (%p1496) target = $region64
        $region63: #{tpu_custom_call.1} parent=55 // pred_region
          %s1500 = ssub.s32 128, 128
          %1501 = vsyncadd %s1487, %s1500
          %s1502 = sadd.s32 %s33, %s32
          %s1503 = smul.addr %s1502, 128
          %s1504 = scalar_lea.hbm %s9, %s1503
          %s1506 = sshll.u32 %s1490, 4
          %s1507 = int_to_ptr.vmem [resolvable:$true] %s1506
          %1509 = dma.vmem_to_hbm [thread:$0]  %s1507, 128, %s1504, %s1487
        $region64: #{tpu_custom_call.1} parent=55 // pred_fallthru
          _
        // Predicated region
        $region65: #{tpu_custom_call.1} parent=55 // pred_check
          %p1510 = pneg %p282
        $region66: #{tpu_custom_call.1} parent=55 // pred_check_branch
          %1512 = sbr.rel (%p1510) target = $region68
        $region67: #{tpu_custom_call.1} parent=55 // pred_region
          %s1514 = ssub.s32 128, 128
          %1515 = vsyncadd %s1492, %s1514
          %s1516 = sadd.s32 %s33, %s32
          %s1517 = smul.addr %s1516, 128
          %s1518 = scalar_lea.hbm %s10, %s1517
          %s1520 = sshll.u32 %s1495, 4
          %s1521 = int_to_ptr.vmem [resolvable:$true] %s1520
          %1523 = dma.vmem_to_hbm [thread:$0]  %s1521, 128, %s1518, %s1492
        $region68: #{tpu_custom_call.1} parent=55 // pred_fallthru
          _
      $region56: #{tpu_custom_call.1} parent=5 // pred_fallthru
        _
      %p1524 = scmp.le.s32.totalorder 2, %s23
      // Predicated region
      $region69: #{tpu_custom_call.1} parent=5 // pred_check
        %p1525 = pneg %p1524
      $region70: #{tpu_custom_call.1} parent=5 // pred_check_branch
        %1527 = sbr.rel (%p1525) target = $region72
      $region71: #{tpu_custom_call.1} parent=5 // pred_region
        %s1528 = ssub.s32 %s23, 2
        // Predicated region
        $region73: #{tpu_custom_call.1} parent=71 // pred_check
          %p1529 = pneg %p260
        $region74: #{tpu_custom_call.1} parent=71 // pred_check_branch
          %1531 = sbr.rel (%p1529) target = $region76
        $region75: #{tpu_custom_call.1} parent=71 // pred_region
          %s1532 = sand.u32 %s245, 1
          %s1533 = scalar_lea.sflag [#allocation5], %s1532
          %s1534 = sand.u32 %s245, 1
          %s1535 = smul.addr %s1534, 8
          %s1536 = scalar_lea.vmem [#allocation4], %s1535
          %1537 = dma.done %s1533, 128
        $region76: #{tpu_custom_call.1} parent=71 // pred_fallthru
          _
        // Predicated region
        $region77: #{tpu_custom_call.1} parent=71 // pred_check
          %p1538 = pneg %p288
        $region78: #{tpu_custom_call.1} parent=71 // pred_check_branch
          %1540 = sbr.rel (%p1538) target = $region80
        $region79: #{tpu_custom_call.1} parent=71 // pred_region
          %s1541 = sand.u32 %s273, 1
          %s1542 = scalar_lea.sflag [#allocation7], %s1541
          %s1543 = sand.u32 %s273, 1
          %s1544 = smul.addr %s1543, 8
          %s1545 = scalar_lea.vmem [#allocation6], %s1544
          %1546 = dma.done %s1542, 128
        $region80: #{tpu_custom_call.1} parent=71 // pred_fallthru
          _
      $region72: #{tpu_custom_call.1} parent=5 // pred_fallthru
        _
    $region6: #{tpu_custom_call.1} parent=1 // loop_footer
      %s27 = sadd.s32 1, %s23
    $region7: #{tpu_custom_call.1} parent=1 // loop_footer_branch
      %22 = sbr.rel target = $region3
    $region8: #{tpu_custom_call.1} parent=1 // loop_exit
      _
    %1547 = vsyncpa [#allocation5], 1
    %s1548 = scalar_lea.sflag [#allocation5], 1
    %1549 = vsyncpa %s1548, 1
    %1550 = vsyncpa [#allocation7], 1
    %s1551 = scalar_lea.sflag [#allocation7], 1
    %1552 = vsyncpa %s1551, 1

</llo_original>
